<compile_context>
chip_gen: v5e
topology: v5e:2x2
jax: 0.10.0
libtpu: 0.0.40
codegen_flags: <defaults>
</compile_context>

<pallas_src>
import functools

import numpy as np
import jax
import jax.numpy as jnp
from jax.experimental import pallas as pl
from jax.experimental.pallas import tpu as pltpu


# ----------------------------- Pallas kernel --------------------------------

def _finetune_kernel(patches_ref, convw_ref, convb_ref, fcw_ref, fcb_ref, out_ref,
                     *, batch_block, hw):
    """Fused forward for one block of `batch_block` samples.

    patches_ref : (B*HW, Kp)   bf16   im2col patches (K zero-padded to Kp)
    convw_ref   : (Kp, C_feat) bf16   conv weight, patch order (di, dj, c)
    convb_ref   : (1, C_feat)  f32    conv bias
    fcw_ref     : (C_feat, NCp) bf16  classifier weight (classes zero-padded)
    fcb_ref     : (1, NCp)     f32    classifier bias (zero-padded)
    out_ref     : (B, NCp)     f32    logits (lane-dense, padded classes)
    """
    B = batch_block
    BHW = B * hw

    # Conv as ONE big MXU matmul: (B*HW, Kp) @ (Kp, C_feat), f32 accumulation.
    feat = jnp.dot(patches_ref[...], convw_ref[...],
                   preferred_element_type=jnp.float32)
    feat = jnp.maximum(feat + convb_ref[...], 0.0)            # bias + ReLU in f32

    # Per-sample global average pool via a pooling-matrix matmul:
    #   pool[b, m] = 1/HW if sample(m) == b else 0     (keeps everything 2D,
    #   no in-kernel reshapes; the MXU has plenty of slack here).
    b_idx = jax.lax.broadcasted_iota(jnp.int32, (B, BHW), 0)
    m_idx = jax.lax.broadcasted_iota(jnp.int32, (B, BHW), 1)
    in_row = (m_idx >= b_idx * hw) & (m_idx < (b_idx + 1) * hw)
    pool = jnp.where(in_row, 1.0 / hw, 0.0).astype(jnp.float32)
    pooled = jnp.dot(pool, feat, preferred_element_type=jnp.float32)  # (B, C_feat)

    # Classifier: Linear(C_feat, num_classes) with lane-dense (padded) output.
    y = jnp.dot(pooled.astype(fcw_ref.dtype), fcw_ref[...],
                preferred_element_type=jnp.float32)
    y = y + fcb_ref[...]
    out_ref[...] = y.astype(out_ref.dtype)


# ----------------------------- wrapper ---------------------------------------

def finetune_forward(x_nchw, conv_w, conv_b, fc_w, fc_b, *, block_batch=None):
    """x_nchw: (N, C_in, H, W) f32.  conv_w: (K, C_feat) with K = 9*C_in,
    fc_w: (C_feat, num_classes)  (transpose of nn.Linear's (out, in) layout).
    Returns (N, num_classes) f32."""
    N, C_in, H, W = x_nchw.shape
    kh = kw = 3
    K = kh * kw * C_in
    HW = H * W
    C_feat = conv_w.shape[1]
    num_classes = fc_w.shape[1]

    # Padded sizes: lane-dense last dims and aligned contraction.
    Kp = ((K + 127) // 128) * 128
    NCp = ((num_classes + 127) // 128) * 128
    B = block_batch if block_batch is not None else (N if N <= 8 else 8)
    Np = ((N + B - 1) // B) * B            # batch padded to a multiple of B

    # ---- glue: NCHW -> NHWC, im2col (same padding, stride 1) ----
    # TODO(synk): move im2col into the kernel (halo DMA + VMEM shifts) to avoid
    #             the HBM-materialized patch tensor; at these shapes it is tiny.
    x = jnp.transpose(x_nchw, (0, 2, 3, 1))                    # NHWC
    xp = jnp.pad(x, ((0, 0), (1, 1), (1, 1), (0, 0)))
    cols = [xp[:, di:di + H, dj:dj + W, :] for di in range(kh) for dj in range(kw)]
    patches = jnp.concatenate(cols, axis=-1).reshape(N * HW, K).astype(jnp.float32)
    patches = jnp.pad(patches, ((0, (Np - N) * HW), (0, Kp - K)))
    patches = patches.astype(jnp.bfloat16)                     # MXU operand

    convw_p = jnp.pad(conv_w.astype(jnp.float32), ((0, Kp - K), (0, 0))).astype(jnp.bfloat16)
    convb_p = conv_b.reshape(1, C_feat).astype(jnp.float32)
    fcw_p = jnp.pad(fc_w.astype(jnp.float32),
                    ((0, 0), (0, NCp - num_classes))).astype(jnp.bfloat16)
    fcb_p = jnp.pad(fc_b.astype(jnp.float32),
                    ((0, NCp - num_classes),)).reshape(1, NCp)

    grid = (Np // B,)
    flops = (2 * Np * HW * Kp * C_feat          # conv matmul
             + 2 * Np * B * HW * C_feat         # pooling matmul
             + 2 * Np * C_feat * NCp)           # classifier matmul
    bytes_accessed = (patches.size * 2 + convw_p.size * 2 + fcw_p.size * 2
                      + convb_p.size * 4 + fcb_p.size * 4 + Np * NCp * 4)

    kernel = functools.partial(_finetune_kernel, batch_block=B, hw=HW)

    out = pl.pallas_call(
        kernel,
        out_shape=jax.ShapeDtypeStruct((Np, NCp), jnp.float32),
        grid_spec=pltpu.PrefetchScalarGridSpec(
            num_scalar_prefetch=0,
            grid=grid,
            in_specs=[
                pl.BlockSpec((B * HW, Kp), lambda g: (g, 0)),          # patches
                pl.BlockSpec((Kp, C_feat), lambda g: (0, 0)),          # conv weight
                pl.BlockSpec((1, C_feat), lambda g: (0, 0)),           # conv bias
                pl.BlockSpec((C_feat, NCp), lambda g: (0, 0)),         # fc weight
                pl.BlockSpec((1, NCp), lambda g: (0, 0)),              # fc bias
            ],
            out_specs=pl.BlockSpec((B, NCp), lambda g: (g, 0)),
        ),
        compiler_params=pltpu.CompilerParams(
            dimension_semantics=("parallel",),
            vmem_limit_bytes=32 * 1024 * 1024),
        cost_estimate=pl.CostEstimate(flops=flops, transcendentals=0,
                                      bytes_accessed=bytes_accessed),
    )(patches, convw_p, convb_p, fcw_p, fcb_p)

    return out[:N, :num_classes]


# ----------------------------- reference (plain JAX) -------------------------
# Same dtype policy as the kernel (bf16 MXU operands, f32 accumulation /
# elementwise) so the comparison isolates kernel structure, not rounding.

def finetune_forward_ref(x_nchw, conv_w, conv_b, fc_w, fc_b):
    N, C_in, H, W = x_nchw.shape
    kh = kw = 3
    HW = H * W
    x = jnp.transpose(x_nchw, (0, 2, 3, 1))
    xp = jnp.pad(x, ((0, 0), (1, 1), (1, 1), (0, 0)))
    cols = [xp[:, di:di + H, dj:dj + W, :] for di in range(kh) for dj in range(kw)]
    patches = jnp.concatenate(cols, axis=-1).reshape(N * HW, kh * kw * C_in)
    feat = jnp.dot(patches.astype(jnp.bfloat16), conv_w.astype(jnp.bfloat16),
                   preferred_element_type=jnp.float32)
    feat = jnp.maximum(feat + conv_b[None, :].astype(jnp.float32), 0.0)
    pooled = jnp.mean(feat.reshape(N, HW, -1), axis=1)               # (N, C_feat)
    y = jnp.dot(pooled.astype(jnp.bfloat16), fc_w.astype(jnp.bfloat16),
                preferred_element_type=jnp.float32)
    return y + fc_b[None, :].astype(jnp.float32)


# ----------------------------- main ------------------------------------------

if __name__ == "__main__":
    key = jax.random.PRNGKey(0)
    k_x, k_cw, k_cb, k_fw, k_fb = jax.random.split(key, 5)

    # Small shapes: batch=2, C_in=3 (RGB), spatial=16, resnet feature dim=512.
    N, C_in, H, W = 2, 3, 16, 16
    C_feat = 512
    num_classes = 8
    K = 3 * 3 * C_in

    x = jax.random.normal(k_x, (N, C_in, H, W), dtype=jnp.float32)
    conv_w = jax.random.normal(k_cw, (K, C_feat), dtype=jnp.float32) * 0.05
    conv_b = jax.random.normal(k_cb, (C_feat,), dtype=jnp.float32) * 0.01
    fc_w = jax.random.normal(k_fw, (C_feat, num_classes), dtype=jnp.float32) * 0.05
    fc_b = jax.random.normal(k_fb, (num_classes,), dtype=jnp.float32) * 0.01

    y = jax.block_until_ready(finetune_forward(x, conv_w, conv_b, fc_w, fc_b))
    y_ref = jax.block_until_ready(finetune_forward_ref(x, conv_w, conv_b, fc_w, fc_b))

    np.testing.assert_allclose(np.asarray(y), np.asarray(y_ref), rtol=1e-2, atol=1e-3)

    print("KERNEL_OK")
</pallas_src>

<mosaic_0001>
module attributes {stable_mosaic.version = 11 : i64} {
  func.func @_finetune_kernel(%arg0: i32, %arg1: memref<512x128xbf16, #tpu.memory_space<vmem>>, %arg2: memref<128x512xbf16, #tpu.memory_space<vmem>>, %arg3: memref<1x512xf32, #tpu.memory_space<vmem>>, %arg4: memref<512x128xbf16, #tpu.memory_space<vmem>>, %arg5: memref<1x128xf32, #tpu.memory_space<vmem>>, %arg6: memref<2x128xf32, #tpu.memory_space<vmem>>) attributes {dimension_semantics = [#tpu.dimension_semantics<parallel>], iteration_bounds = array<i64: 1>, scalar_prefetch = 0 : i64, scratch_operands = 0 : i64, tpu.core_type = #tpu.core_type<tc>, window_params = [{transform_indices = @transform_0, window_bounds = array<i64: 512, 128>}, {pipeline_mode = #tpu.pipeline_mode<synchronous>, transform_indices = @transform_1, window_bounds = array<i64: 128, 512>}, {pipeline_mode = #tpu.pipeline_mode<synchronous>, transform_indices = @transform_2, window_bounds = array<i64: 1, 512>}, {pipeline_mode = #tpu.pipeline_mode<synchronous>, transform_indices = @transform_3, window_bounds = array<i64: 512, 128>}, {pipeline_mode = #tpu.pipeline_mode<synchronous>, transform_indices = @transform_4, window_bounds = array<i64: 1, 128>}, {transform_indices = @transform_5, window_bounds = array<i64: 2, 128>}]} {
    %c0 = arith.constant 0 : index
    %c0_0 = arith.constant 0 : index
    %0 = vector.load %arg1[%c0, %c0_0] : memref<512x128xbf16, #tpu.memory_space<vmem>>, vector<512x128xbf16>
    %c0_1 = arith.constant 0 : index
    %c0_2 = arith.constant 0 : index
    %1 = vector.load %arg2[%c0_1, %c0_2] : memref<128x512xbf16, #tpu.memory_space<vmem>>, vector<128x512xbf16>
    %cst = arith.constant dense<0.000000e+00> : vector<512x512xf32>
    %2 = tpu.matmul %0, %1, %cst {dimension_numbers = #tpu.dot_dimension_numbers<[1], [0], [0], [1], [0, 0, 1, 1], [], []>} : vector<512x128xbf16>, vector<128x512xbf16>, vector<512x512xf32> -> vector<512x512xf32>
    %c0_3 = arith.constant 0 : index
    %c0_4 = arith.constant 0 : index
    %3 = vector.load %arg3[%c0_3, %c0_4] : memref<1x512xf32, #tpu.memory_space<vmem>>, vector<1x512xf32>
    %4 = vector.broadcast %3 : vector<1x512xf32> to vector<512x512xf32>
    %5 = arith.addf %2, %4 : vector<512x512xf32>
    %cst_5 = arith.constant 0.000000e+00 : f32
    %6 = vector.broadcast %cst_5 : f32 to vector<512x512xf32>
    %7 = arith.maximumf %5, %6 : vector<512x512xf32>
    %8 = tpu.iota {dimensions = array<i32: 0>} : vector<2x512xi32>
    %9 = tpu.iota {dimensions = array<i32: 1>} : vector<2x512xi32>
    %c256_i32 = arith.constant 256 : i32
    %10 = vector.broadcast %c256_i32 : i32 to vector<2x512xi32>
    %11 = arith.muli %8, %10 : vector<2x512xi32>
    %12 = arith.cmpi sge, %9, %11 : vector<2x512xi32>
    %c1_i32 = arith.constant 1 : i32
    %13 = vector.broadcast %c1_i32 : i32 to vector<2x512xi32>
    %14 = arith.addi %8, %13 : vector<2x512xi32>
    %c256_i32_6 = arith.constant 256 : i32
    %15 = vector.broadcast %c256_i32_6 : i32 to vector<2x512xi32>
    %16 = arith.muli %14, %15 : vector<2x512xi32>
    %17 = arith.cmpi slt, %9, %16 : vector<2x512xi32>
    %18 = arith.andi %12, %17 : vector<2x512xi1>
    %cst_7 = arith.constant 3.906250e-03 : f32
    %cst_8 = arith.constant 0.000000e+00 : f32
    %19 = vector.broadcast %cst_7 : f32 to vector<2x512xf32>
    %20 = vector.broadcast %cst_8 : f32 to vector<2x512xf32>
    %21 = arith.select %18, %19, %20 : vector<2x512xi1>, vector<2x512xf32>
    %cst_9 = arith.constant dense<0.000000e+00> : vector<2x512xf32>
    %22 = tpu.matmul %21, %7, %cst_9 {dimension_numbers = #tpu.dot_dimension_numbers<[1], [0], [0], [1], [0, 0, 1, 1], [], []>} : vector<2x512xf32>, vector<512x512xf32>, vector<2x512xf32> -> vector<2x512xf32>
    %23 = arith.truncf %22 : vector<2x512xf32> to vector<2x512xbf16>
    %c0_10 = arith.constant 0 : index
    %c0_11 = arith.constant 0 : index
    %24 = vector.load %arg4[%c0_10, %c0_11] : memref<512x128xbf16, #tpu.memory_space<vmem>>, vector<512x128xbf16>
    %cst_12 = arith.constant dense<0.000000e+00> : vector<2x128xf32>
    %25 = tpu.matmul %23, %24, %cst_12 {dimension_numbers = #tpu.dot_dimension_numbers<[1], [0], [0], [1], [0, 0, 1, 1], [], []>} : vector<2x512xbf16>, vector<512x128xbf16>, vector<2x128xf32> -> vector<2x128xf32>
    %c0_13 = arith.constant 0 : index
    %c0_14 = arith.constant 0 : index
    %26 = vector.load %arg5[%c0_13, %c0_14] : memref<1x128xf32, #tpu.memory_space<vmem>>, vector<1x128xf32>
    %27 = vector.broadcast %26 : vector<1x128xf32> to vector<2x128xf32>
    %28 = arith.addf %25, %27 : vector<2x128xf32>
    %c0_15 = arith.constant 0 : index
    %c0_16 = arith.constant 0 : index
    %29 = vector.load %arg6[%c0_15, %c0_16] : memref<2x128xf32, #tpu.memory_space<vmem>>, vector<2x128xf32>
    tpu.vector_store %arg6[%c0_15, %c0_16], %28 {strides = array<i32>} : memref<2x128xf32, #tpu.memory_space<vmem>>, vector<2x128xf32>,
    return
  }
  func.func @transform_0(%arg0: i32) -> (i32, i32) {
    %c0_i32 = arith.constant 0 : i32
    %c0_i32_0 = arith.constant 0 : i32
    return %arg0, %c0_i32 : i32, i32
  }
  func.func @transform_1(%arg0: i32) -> (i32, i32) {
    %c0_i32 = arith.constant 0 : i32
    %c0_i32_0 = arith.constant 0 : i32
    %c0_i32_1 = arith.constant 0 : i32
    return %c0_i32, %c0_i32_0 : i32, i32
  }
  func.func @transform_2(%arg0: i32) -> (i32, i32) {
    %c0_i32 = arith.constant 0 : i32
    %c0_i32_0 = arith.constant 0 : i32
    %c0_i32_1 = arith.constant 0 : i32
    return %c0_i32, %c0_i32_0 : i32, i32
  }
  func.func @transform_3(%arg0: i32) -> (i32, i32) {
    %c0_i32 = arith.constant 0 : i32
    %c0_i32_0 = arith.constant 0 : i32
    %c0_i32_1 = arith.constant 0 : i32
    return %c0_i32, %c0_i32_0 : i32, i32
  }
  func.func @transform_4(%arg0: i32) -> (i32, i32) {
    %c0_i32 = arith.constant 0 : i32
    %c0_i32_0 = arith.constant 0 : i32
    %c0_i32_1 = arith.constant 0 : i32
    return %c0_i32, %c0_i32_0 : i32, i32
  }
  func.func @transform_5(%arg0: i32) -> (i32, i32) {
    %c0_i32 = arith.constant 0 : i32
    %c0_i32_0 = arith.constant 0 : i32
    return %arg0, %c0_i32 : i32, i32
  }
}

</mosaic_0001>

<llo_original>
// kernel: tpu_custom_call.1
$region0: #{tpu_custom_call.1}
  #allocation0 [shape = 'u32[]', space=smem, size = 0x4, offset = 0x4, fixed_abs, tag = 'smem constant byte address 0x4 - core index']
  #allocation1 [shape = 'u32[72,128]{1,0:T(1,128)}', space=vmem, size = 0x9000, scoped, tag = 'internal scratch']
  %s0 = inlined_call_operand.hbm [shape: bf16[512,128], index: 0, kind: input, shape index: {}]
  %s1 = inlined_call_operand.hbm [shape: bf16[128,512], index: 1, kind: input, shape index: {}]
  %s2 = inlined_call_operand.hbm [shape: f32[1,512], index: 2, kind: input, shape index: {}]
  %s3 = inlined_call_operand.hbm [shape: bf16[512,128], index: 3, kind: input, shape index: {}]
  %s4 = inlined_call_operand.vmem [shape: f32[1,128], index: 4, kind: input, shape index: {}]
  %s5 = inlined_call_operand.hbm [shape: f32[2,128], index: 5, kind: output, shape index: {}]
  %s6 = sld [smem:[#allocation0]]
  $region46: #{tpu_custom_call.1} parent=0
    _
  %s8 = ssub.s32 1, %s6
  %s9 = scalar_select 0, %s8, %s6
  $region1: #{tpu_custom_call.1} parent=0
    #allocation2 [shape = 'u8[131072]{0}', space=vmem, size = 0x20000, scoped, tag = 'input window, operand 0, single buffered']
    #allocation3 [shape = 's32[1]{0}', space=sflag, size = 0x4, scoped, tag = 'scoped memory for tpu_custom_call.1']
    #allocation4 [shape = 's32[1]{0}', space=sflag, size = 0x4, scoped, tag = 'scoped memory for tpu_custom_call.1']
    #allocation5 [shape = 'u8[131072]{0}', space=vmem, size = 0x20000, scoped, tag = 'input window, operand 1, single buffered']
    #allocation6 [shape = 's32[1]{0}', space=sflag, size = 0x4, scoped, tag = 'scoped memory for tpu_custom_call.1']
    #allocation7 [shape = 'u8[2048]{0}', space=vmem, size = 0x800, scoped, tag = 'input window, operand 2, single buffered']
    #allocation8 [shape = 'u8[131072]{0}', space=vmem, size = 0x20000, scoped, tag = 'input window, operand 3, single buffered']
    #allocation9 [shape = 's32[1]{0}', space=sflag, size = 0x4, scoped, tag = 'scoped memory for tpu_custom_call.1']
    #allocation10 [shape = 'u8[1024]{0}', space=vmem, size = 0x400, scoped, tag = 'output window, operand 0, single buffered']
    %10 = vsyncpa [#allocation3], 0
    %11 = vsyncpa [#allocation6], 0
    %12 = vsyncpa [#allocation9], 0
    %13 = vsyncpa [#allocation4], 0
    // Predicated region
    $region2: #{tpu_custom_call.1} parent=1 // pred_check
      _
    $region3: #{tpu_custom_call.1} parent=1 // pred_check_branch
      %15 = sbr.rel (0) target = $region5
    $region4: #{tpu_custom_call.1} parent=1 // pred_region
      %17 = vsyncadd [#allocation3], 0
      %s18 = sshll.u32 %s0, 4
      %s19 = int_to_ptr.hbm [resolvable:$true] %s18
      %s20 = sshll.u32 [#allocation2], 4
      %s21 = int_to_ptr.vmem [resolvable:$true] %s20
      %26 = dma.hbm_to_vmem [thread:$0]  %s19, 4096, %s21, [#allocation3], 64, 64, 4
    $region5: #{tpu_custom_call.1} parent=1 // pred_fallthru
      _
    // Predicated region
    $region6: #{tpu_custom_call.1} parent=1 // pred_check
      _
    $region7: #{tpu_custom_call.1} parent=1 // pred_check_branch
      %28 = sbr.rel (0) target = $region9
    $region8: #{tpu_custom_call.1} parent=1 // pred_region
      %30 = vsyncadd [#allocation6], 0
      %s31 = sshll.u32 %s1, 4
      %s32 = int_to_ptr.hbm [resolvable:$true] %s31
      %s33 = sshll.u32 [#allocation5], 4
      %s34 = int_to_ptr.vmem [resolvable:$true] %s33
      %39 = dma.hbm_to_vmem [thread:$0]  %s32, 4096, %s34, [#allocation6], 256, 256, 16
    $region9: #{tpu_custom_call.1} parent=1 // pred_fallthru
      _
    // Predicated region
    $region10: #{tpu_custom_call.1} parent=1 // pred_check
      _
    $region11: #{tpu_custom_call.1} parent=1 // pred_check_branch
      %41 = sbr.rel (0) target = $region13
    $region12: #{tpu_custom_call.1} parent=1 // pred_region
      %43 = vsyncadd [#allocation6], 0
      %s45 = sshll.u32 %s2, 4
      %s46 = int_to_ptr.hbm [resolvable:$true] %s45
      %s47 = sshll.u32 [#allocation7], 4
      %s48 = int_to_ptr.vmem [resolvable:$true] %s47
      %50 = dma.hbm_to_vmem [thread:$0]  %s46, 64, %s48, [#allocation6]
    $region13: #{tpu_custom_call.1} parent=1 // pred_fallthru
      _
    // Predicated region
    $region14: #{tpu_custom_call.1} parent=1 // pred_check
      _
    $region15: #{tpu_custom_call.1} parent=1 // pred_check_branch
      %52 = sbr.rel (0) target = $region17
    $region16: #{tpu_custom_call.1} parent=1 // pred_region
      %54 = vsyncadd [#allocation9], 0
      %s55 = sshll.u32 %s3, 4
      %s56 = int_to_ptr.hbm [resolvable:$true] %s55
      %s57 = sshll.u32 [#allocation8], 4
      %s58 = int_to_ptr.vmem [resolvable:$true] %s57
      %63 = dma.hbm_to_vmem [thread:$0]  %s56, 4096, %s58, [#allocation9], 64, 64, 4
    $region17: #{tpu_custom_call.1} parent=1 // pred_fallthru
      _
    // Predicated region
    $region18: #{tpu_custom_call.1} parent=1 // pred_check
      _
    $region19: #{tpu_custom_call.1} parent=1 // pred_check_branch
      %65 = sbr.rel (0) target = $region21
    $region20: #{tpu_custom_call.1} parent=1 // pred_region
      _
    $region21: #{tpu_custom_call.1} parent=1 // pred_fallthru
      _
    // Predicated region
    $region22: #{tpu_custom_call.1} parent=1 // pred_check
      _
    $region23: #{tpu_custom_call.1} parent=1 // pred_check_branch
      %67 = sbr.rel (0) target = $region25
    $region24: #{tpu_custom_call.1} parent=1 // pred_region
      %69 = dma.done [#allocation3], 4096
    $region25: #{tpu_custom_call.1} parent=1 // pred_fallthru
      _
    // Predicated region
    $region26: #{tpu_custom_call.1} parent=1 // pred_check
      _
    $region27: #{tpu_custom_call.1} parent=1 // pred_check_branch
      %71 = sbr.rel (0) target = $region29
    $region28: #{tpu_custom_call.1} parent=1 // pred_region
      %73 = dma.done [#allocation6], 4096
    $region29: #{tpu_custom_call.1} parent=1 // pred_fallthru
      _
    // Predicated region
    $region30: #{tpu_custom_call.1} parent=1 // pred_check
      _
    $region31: #{tpu_custom_call.1} parent=1 // pred_check_branch
      %75 = sbr.rel (0) target = $region33
    $region32: #{tpu_custom_call.1} parent=1 // pred_region
      %77 = dma.done [#allocation6], 64
    $region33: #{tpu_custom_call.1} parent=1 // pred_fallthru
      _
    // Predicated region
    $region34: #{tpu_custom_call.1} parent=1 // pred_check
      _
    $region35: #{tpu_custom_call.1} parent=1 // pred_check_branch
      %79 = sbr.rel (0) target = $region37
    $region36: #{tpu_custom_call.1} parent=1 // pred_region
      %81 = dma.done [#allocation9], 4096
    $region37: #{tpu_custom_call.1} parent=1 // pred_fallthru
      _
    %v82 = vld [vmem:[#allocation2] sm:$0xf]
    %v83 = vld [vmem:[#allocation2 + $0x4] sm:$0xf]
    %v84 = vld [vmem:[#allocation2 + $0x8] sm:$0xf]
    %v85 = vld [vmem:[#allocation2 + $0xc] sm:$0xf]
    %v86 = vld [vmem:[#allocation2 + $0x10] sm:$0xf]
    %v87 = vld [vmem:[#allocation2 + $0x14] sm:$0xf]
    %v88 = vld [vmem:[#allocation2 + $0x18] sm:$0xf]
    %v89 = vld [vmem:[#allocation2 + $0x1c] sm:$0xf]
    %v90 = vld [vmem:[#allocation2 + $0x20] sm:$0xf]
    %v91 = vld [vmem:[#allocation2 + $0x24] sm:$0xf]
    %v92 = vld [vmem:[#allocation2 + $0x28] sm:$0xf]
    %v93 = vld [vmem:[#allocation2 + $0x2c] sm:$0xf]
    %v94 = vld [vmem:[#allocation2 + $0x30] sm:$0xf]
    %v95 = vld [vmem:[#allocation2 + $0x34] sm:$0xf]
    %v96 = vld [vmem:[#allocation2 + $0x38] sm:$0xf]
    %v97 = vld [vmem:[#allocation2 + $0x3c] sm:$0xf]
    %v98 = vld [vmem:[#allocation2 + $0x40] sm:$0xf]
    %v99 = vld [vmem:[#allocation2 + $0x44] sm:$0xf]
    %v100 = vld [vmem:[#allocation2 + $0x48] sm:$0xf]
    %v101 = vld [vmem:[#allocation2 + $0x4c] sm:$0xf]
    %v102 = vld [vmem:[#allocation2 + $0x50] sm:$0xf]
    %v103 = vld [vmem:[#allocation2 + $0x54] sm:$0xf]
    %v104 = vld [vmem:[#allocation2 + $0x58] sm:$0xf]
    %v105 = vld [vmem:[#allocation2 + $0x5c] sm:$0xf]
    %v106 = vld [vmem:[#allocation2 + $0x60] sm:$0xf]
    %v107 = vld [vmem:[#allocation2 + $0x64] sm:$0xf]
    %v108 = vld [vmem:[#allocation2 + $0x68] sm:$0xf]
    %v109 = vld [vmem:[#allocation2 + $0x6c] sm:$0xf]
    %v110 = vld [vmem:[#allocation2 + $0x70] sm:$0xf]
    %v111 = vld [vmem:[#allocation2 + $0x74] sm:$0xf]
    %v112 = vld [vmem:[#allocation2 + $0x78] sm:$0xf]
    %v113 = vld [vmem:[#allocation2 + $0x7c] sm:$0xf]
    %v114 = vld [vmem:[#allocation2 + $0x80] sm:$0xf]
    %v115 = vld [vmem:[#allocation2 + $0x84] sm:$0xf]
    %v116 = vld [vmem:[#allocation2 + $0x88] sm:$0xf]
    %v117 = vld [vmem:[#allocation2 + $0x8c] sm:$0xf]
    %v118 = vld [vmem:[#allocation2 + $0x90] sm:$0xf]
    %v119 = vld [vmem:[#allocation2 + $0x94] sm:$0xf]
    %v120 = vld [vmem:[#allocation2 + $0x98] sm:$0xf]
    %v121 = vld [vmem:[#allocation2 + $0x9c] sm:$0xf]
    %v122 = vld [vmem:[#allocation2 + $0xa0] sm:$0xf]
    %v123 = vld [vmem:[#allocation2 + $0xa4] sm:$0xf]
    %v124 = vld [vmem:[#allocation2 + $0xa8] sm:$0xf]
    %v125 = vld [vmem:[#allocation2 + $0xac] sm:$0xf]
    %v126 = vld [vmem:[#allocation2 + $0xb0] sm:$0xf]
    %v127 = vld [vmem:[#allocation2 + $0xb4] sm:$0xf]
    %v128 = vld [vmem:[#allocation2 + $0xb8] sm:$0xf]
    %v129 = vld [vmem:[#allocation2 + $0xbc] sm:$0xf]
    %v130 = vld [vmem:[#allocation2 + $0xc0] sm:$0xf]
    %v131 = vld [vmem:[#allocation2 + $0xc4] sm:$0xf]
    %v132 = vld [vmem:[#allocation2 + $0xc8] sm:$0xf]
    %v133 = vld [vmem:[#allocation2 + $0xcc] sm:$0xf]
    %v134 = vld [vmem:[#allocation2 + $0xd0] sm:$0xf]
    %v135 = vld [vmem:[#allocation2 + $0xd4] sm:$0xf]
    %v136 = vld [vmem:[#allocation2 + $0xd8] sm:$0xf]
    %v137 = vld [vmem:[#allocation2 + $0xdc] sm:$0xf]
    %v138 = vld [vmem:[#allocation2 + $0xe0] sm:$0xf]
    %v139 = vld [vmem:[#allocation2 + $0xe4] sm:$0xf]
    %v140 = vld [vmem:[#allocation2 + $0xe8] sm:$0xf]
    %v141 = vld [vmem:[#allocation2 + $0xec] sm:$0xf]
    %v142 = vld [vmem:[#allocation2 + $0xf0] sm:$0xf]
    %v143 = vld [vmem:[#allocation2 + $0xf4] sm:$0xf]
    %v144 = vld [vmem:[#allocation2 + $0xf8] sm:$0xf]
    %v145 = vld [vmem:[#allocation2 + $0xfc] sm:$0xf]
    %v146 = vld [vmem:[#allocation5] sm:$0xff]
    %v147 = vld [vmem:[#allocation5 + $0x8] sm:$0xff]
    %v148 = vld [vmem:[#allocation5 + $0x10] sm:$0xff]
    %v149 = vld [vmem:[#allocation5 + $0x18] sm:$0xff]
    %v150 = vld [vmem:[#allocation5 + $0x20] sm:$0xff]
    %v151 = vld [vmem:[#allocation5 + $0x28] sm:$0xff]
    %v152 = vld [vmem:[#allocation5 + $0x30] sm:$0xff]
    %v153 = vld [vmem:[#allocation5 + $0x38] sm:$0xff]
    %v154 = vld [vmem:[#allocation5 + $0x40] sm:$0xff]
    %v155 = vld [vmem:[#allocation5 + $0x48] sm:$0xff]
    %v156 = vld [vmem:[#allocation5 + $0x50] sm:$0xff]
    %v157 = vld [vmem:[#allocation5 + $0x58] sm:$0xff]
    %v158 = vld [vmem:[#allocation5 + $0x60] sm:$0xff]
    %v159 = vld [vmem:[#allocation5 + $0x68] sm:$0xff]
    %v160 = vld [vmem:[#allocation5 + $0x70] sm:$0xff]
    %v161 = vld [vmem:[#allocation5 + $0x78] sm:$0xff]
    %v162 = vld [vmem:[#allocation5 + $0x80] sm:$0xff]
    %v163 = vld [vmem:[#allocation5 + $0x88] sm:$0xff]
    %v164 = vld [vmem:[#allocation5 + $0x90] sm:$0xff]
    %v165 = vld [vmem:[#allocation5 + $0x98] sm:$0xff]
    %v166 = vld [vmem:[#allocation5 + $0xa0] sm:$0xff]
    %v167 = vld [vmem:[#allocation5 + $0xa8] sm:$0xff]
    %v168 = vld [vmem:[#allocation5 + $0xb0] sm:$0xff]
    %v169 = vld [vmem:[#allocation5 + $0xb8] sm:$0xff]
    %v170 = vld [vmem:[#allocation5 + $0xc0] sm:$0xff]
    %v171 = vld [vmem:[#allocation5 + $0xc8] sm:$0xff]
    %v172 = vld [vmem:[#allocation5 + $0xd0] sm:$0xff]
    %v173 = vld [vmem:[#allocation5 + $0xd8] sm:$0xff]
    %v174 = vld [vmem:[#allocation5 + $0xe0] sm:$0xff]
    %v175 = vld [vmem:[#allocation5 + $0xe8] sm:$0xff]
    %v176 = vld [vmem:[#allocation5 + $0xf0] sm:$0xff]
    %v177 = vld [vmem:[#allocation5 + $0xf8] sm:$0xff]
    %v178 = vld [vmem:[#allocation7] sm:$0xf]
    %v180 = vperm.slane %v178, 0
    %v181 = vperm.slane %v178, 1
    %v182 = vperm.slane %v178, 2
    %v183 = vperm.slane %v178, 3
    %v252 = vunpack.c.l.b16 %v82
    %v253 = vunpack.c.l.b16 %v83
    %v254 = vunpack.c.l.b16 %v84
    %v255 = vunpack.c.l.b16 %v85
    %v256 = vunpack.c.l.b16 %v86
    %v257 = vunpack.c.l.b16 %v87
    %v258 = vunpack.c.l.b16 %v88
    %v259 = vunpack.c.l.b16 %v89
    %v260 = vunpack.c.l.b16 %v90
    %v261 = vunpack.c.l.b16 %v91
    %v262 = vunpack.c.l.b16 %v92
    %v263 = vunpack.c.l.b16 %v93
    %v264 = vunpack.c.l.b16 %v94
    %v265 = vunpack.c.l.b16 %v95
    %v266 = vunpack.c.l.b16 %v96
    %v267 = vunpack.c.l.b16 %v97
    %v268 = vunpack.c.l.b16 %v98
    %v269 = vunpack.c.l.b16 %v99
    %v270 = vunpack.c.l.b16 %v100
    %v271 = vunpack.c.l.b16 %v101
    %v272 = vunpack.c.l.b16 %v102
    %v273 = vunpack.c.l.b16 %v103
    %v274 = vunpack.c.l.b16 %v104
    %v275 = vunpack.c.l.b16 %v105
    %v276 = vunpack.c.l.b16 %v106
    %v277 = vunpack.c.l.b16 %v107
    %v278 = vunpack.c.l.b16 %v108
    %v279 = vunpack.c.l.b16 %v109
    %v280 = vunpack.c.l.b16 %v110
    %v281 = vunpack.c.l.b16 %v111
    %v282 = vunpack.c.l.b16 %v112
    %v283 = vunpack.c.l.b16 %v113
    %v284 = vunpack.c.l.b16 %v114
    %v285 = vunpack.c.l.b16 %v115
    %v286 = vunpack.c.l.b16 %v116
    %v287 = vunpack.c.l.b16 %v117
    %v288 = vunpack.c.l.b16 %v118
    %v289 = vunpack.c.l.b16 %v119
    %v290 = vunpack.c.l.b16 %v120
    %v291 = vunpack.c.l.b16 %v121
    %v292 = vunpack.c.l.b16 %v122
    %v293 = vunpack.c.l.b16 %v123
    %v294 = vunpack.c.l.b16 %v124
    %v295 = vunpack.c.l.b16 %v125
    %v296 = vunpack.c.l.b16 %v126
    %v297 = vunpack.c.l.b16 %v127
    %v298 = vunpack.c.l.b16 %v128
    %v299 = vunpack.c.l.b16 %v129
    %v300 = vunpack.c.l.b16 %v130
    %v301 = vunpack.c.l.b16 %v131
    %v302 = vunpack.c.l.b16 %v132
    %v303 = vunpack.c.l.b16 %v133
    %v304 = vunpack.c.l.b16 %v134
    %v305 = vunpack.c.l.b16 %v135
    %v306 = vunpack.c.l.b16 %v136
    %v307 = vunpack.c.l.b16 %v137
    %v308 = vunpack.c.l.b16 %v138
    %v309 = vunpack.c.l.b16 %v139
    %v310 = vunpack.c.l.b16 %v140
    %v311 = vunpack.c.l.b16 %v141
    %v312 = vunpack.c.l.b16 %v142
    %v313 = vunpack.c.l.b16 %v143
    %v314 = vunpack.c.l.b16 %v144
    %v315 = vunpack.c.l.b16 %v145
    %v316 = vpack.c.b16 %v253, %v252
    %v317 = vpack.c.b16 %v255, %v254
    %v318 = vpack.c.b16 %v257, %v256
    %v319 = vpack.c.b16 %v259, %v258
    %v320 = vpack.c.b16 %v261, %v260
    %v321 = vpack.c.b16 %v263, %v262
    %v322 = vpack.c.b16 %v265, %v264
    %v323 = vpack.c.b16 %v267, %v266
    %v324 = vpack.c.b16 %v269, %v268
    %v325 = vpack.c.b16 %v271, %v270
    %v326 = vpack.c.b16 %v273, %v272
    %v327 = vpack.c.b16 %v275, %v274
    %v328 = vpack.c.b16 %v277, %v276
    %v329 = vpack.c.b16 %v279, %v278
    %v330 = vpack.c.b16 %v281, %v280
    %v331 = vpack.c.b16 %v283, %v282
    %v332 = vpack.c.b16 %v285, %v284
    %v333 = vpack.c.b16 %v287, %v286
    %v334 = vpack.c.b16 %v289, %v288
    %v335 = vpack.c.b16 %v291, %v290
    %v336 = vpack.c.b16 %v293, %v292
    %v337 = vpack.c.b16 %v295, %v294
    %v338 = vpack.c.b16 %v297, %v296
    %v339 = vpack.c.b16 %v299, %v298
    %v340 = vpack.c.b16 %v301, %v300
    %v341 = vpack.c.b16 %v303, %v302
    %v342 = vpack.c.b16 %v305, %v304
    %v343 = vpack.c.b16 %v307, %v306
    %v344 = vpack.c.b16 %v309, %v308
    %v345 = vpack.c.b16 %v311, %v310
    %v346 = vpack.c.b16 %v313, %v312
    %v347 = vpack.c.b16 %v315, %v314
    %v412 = vunpack.c.l.b16 %v146
    %v413 = vunpack.c.h.b16 %v146
    %v414 = vunpack.c.l.b16 %v147
    %v415 = vunpack.c.h.b16 %v147
    %v416 = vunpack.c.l.b16 %v148
    %v417 = vunpack.c.h.b16 %v148
    %v418 = vunpack.c.l.b16 %v149
    %v419 = vunpack.c.h.b16 %v149
    %v420 = vunpack.c.l.b16 %v150
    %v421 = vunpack.c.h.b16 %v150
    %v422 = vunpack.c.l.b16 %v151
    %v423 = vunpack.c.h.b16 %v151
    %v424 = vunpack.c.l.b16 %v152
    %v425 = vunpack.c.h.b16 %v152
    %v426 = vunpack.c.l.b16 %v153
    %v427 = vunpack.c.h.b16 %v153
    %v428 = vunpack.c.l.b16 %v154
    %v429 = vunpack.c.h.b16 %v154
    %v430 = vunpack.c.l.b16 %v155
    %v431 = vunpack.c.h.b16 %v155
    %v432 = vunpack.c.l.b16 %v156
    %v433 = vunpack.c.h.b16 %v156
    %v434 = vunpack.c.l.b16 %v157
    %v435 = vunpack.c.h.b16 %v157
    %v436 = vunpack.c.l.b16 %v158
    %v437 = vunpack.c.h.b16 %v158
    %v438 = vunpack.c.l.b16 %v159
    %v439 = vunpack.c.h.b16 %v159
    %v440 = vunpack.c.l.b16 %v160
    %v441 = vunpack.c.h.b16 %v160
    %v442 = vunpack.c.l.b16 %v161
    %v443 = vunpack.c.h.b16 %v161
    %v444 = vunpack.c.l.b16 %v162
    %v445 = vunpack.c.h.b16 %v162
    %v446 = vunpack.c.l.b16 %v163
    %v447 = vunpack.c.h.b16 %v163
    %v448 = vunpack.c.l.b16 %v164
    %v449 = vunpack.c.h.b16 %v164
    %v450 = vunpack.c.l.b16 %v165
    %v451 = vunpack.c.h.b16 %v165
    %v452 = vunpack.c.l.b16 %v166
    %v453 = vunpack.c.h.b16 %v166
    %v454 = vunpack.c.l.b16 %v167
    %v455 = vunpack.c.h.b16 %v167
    %v456 = vunpack.c.l.b16 %v168
    %v457 = vunpack.c.h.b16 %v168
    %v458 = vunpack.c.l.b16 %v169
    %v459 = vunpack.c.h.b16 %v169
    %v460 = vunpack.c.l.b16 %v170
    %v461 = vunpack.c.h.b16 %v170
    %v462 = vunpack.c.l.b16 %v171
    %v463 = vunpack.c.h.b16 %v171
    %v464 = vunpack.c.l.b16 %v172
    %v465 = vunpack.c.h.b16 %v172
    %v466 = vunpack.c.l.b16 %v173
    %v467 = vunpack.c.h.b16 %v173
    %v468 = vunpack.c.l.b16 %v174
    %v469 = vunpack.c.h.b16 %v174
    %v470 = vunpack.c.l.b16 %v175
    %v471 = vunpack.c.h.b16 %v175
    %v472 = vunpack.c.l.b16 %v176
    %v473 = vunpack.c.h.b16 %v176
    %v474 = vunpack.c.l.b16 %v177
    %v475 = vunpack.c.h.b16 %v177
    %v476 = vpack.c.b16 %v416, %v412
    %v477 = vpack.c.b16 %v417, %v413
    %v478 = vpack.c.b16 %v418, %v414
    %v479 = vpack.c.b16 %v419, %v415
    %v480 = vpack.c.b16 %v424, %v420
    %v481 = vpack.c.b16 %v425, %v421
    %v482 = vpack.c.b16 %v426, %v422
    %v483 = vpack.c.b16 %v427, %v423
    %v484 = vpack.c.b16 %v432, %v428
    %v485 = vpack.c.b16 %v433, %v429
    %v486 = vpack.c.b16 %v434, %v430
    %v487 = vpack.c.b16 %v435, %v431
    %v488 = vpack.c.b16 %v440, %v436
    %v489 = vpack.c.b16 %v441, %v437
    %v490 = vpack.c.b16 %v442, %v438
    %v491 = vpack.c.b16 %v443, %v439
    %v492 = vpack.c.b16 %v448, %v444
    %v493 = vpack.c.b16 %v449, %v445
    %v494 = vpack.c.b16 %v450, %v446
    %v495 = vpack.c.b16 %v451, %v447
    %v496 = vpack.c.b16 %v456, %v452
    %v497 = vpack.c.b16 %v457, %v453
    %v498 = vpack.c.b16 %v458, %v454
    %v499 = vpack.c.b16 %v459, %v455
    %v500 = vpack.c.b16 %v464, %v460
    %v501 = vpack.c.b16 %v465, %v461
    %v502 = vpack.c.b16 %v466, %v462
    %v503 = vpack.c.b16 %v467, %v463
    %v504 = vpack.c.b16 %v472, %v468
    %v505 = vpack.c.b16 %v473, %v469
    %v506 = vpack.c.b16 %v474, %v470
    %v507 = vpack.c.b16 %v475, %v471
    %540 = vmatpush.bf16.msra.mxu0 %v504
    %541 = vmatpush.bf16.msra.mxu0 %v500
    %542 = vmatpush.bf16.msra.mxu0 %v496
    %543 = vmatpush.bf16.msra.mxu0 %v492
    %544 = vmatpush.bf16.msra.mxu0 %v488
    %545 = vmatpush.bf16.msra.mxu0 %v484
    %546 = vmatpush.bf16.msra.mxu0 %v480
    %547 = vmatpush.bf16.msra.mxu0 %v476
    %548 = vmatmul.bf16.gmra.mxu0 %v316
    %v549 = vpop.f32.mrf.mxu0
    %v550 = vadd.f32 %v180, %v549
    %v551 = vpop.f32.mrf.mxu0
    %v552 = vadd.f32 %v180, %v551
    %553 = vmatmul.bf16.gmra.mxu0 %v317
    %v554 = vpop.f32.mrf.mxu0
    %v555 = vadd.f32 %v180, %v554
    %v556 = vpop.f32.mrf.mxu0
    %v557 = vadd.f32 %v180, %v556
    %558 = vmatmul.bf16.gmra.mxu0 %v318
    %v559 = vpop.f32.mrf.mxu0
    %v560 = vadd.f32 %v180, %v559
    %v561 = vpop.f32.mrf.mxu0
    %v562 = vadd.f32 %v180, %v561
    %563 = vmatmul.bf16.gmra.mxu0 %v319
    %v564 = vpop.f32.mrf.mxu0
    %v565 = vadd.f32 %v180, %v564
    %v566 = vpop.f32.mrf.mxu0
    %v567 = vadd.f32 %v180, %v566
    %568 = vmatmul.bf16.gmra.mxu0 %v320
    %v569 = vpop.f32.mrf.mxu0
    %v570 = vadd.f32 %v180, %v569
    %v571 = vpop.f32.mrf.mxu0
    %v572 = vadd.f32 %v180, %v571
    %573 = vmatmul.bf16.gmra.mxu0 %v321
    %v574 = vpop.f32.mrf.mxu0
    %v575 = vadd.f32 %v180, %v574
    %v576 = vpop.f32.mrf.mxu0
    %v577 = vadd.f32 %v180, %v576
    %578 = vmatmul.bf16.gmra.mxu0 %v322
    %v579 = vpop.f32.mrf.mxu0
    %v580 = vadd.f32 %v180, %v579
    %v581 = vpop.f32.mrf.mxu0
    %v582 = vadd.f32 %v180, %v581
    %583 = vmatmul.bf16.gmra.mxu0 %v323
    %v584 = vpop.f32.mrf.mxu0
    %v585 = vadd.f32 %v180, %v584
    %v586 = vpop.f32.mrf.mxu0
    %v587 = vadd.f32 %v180, %v586
    %588 = vmatmul.bf16.gmra.mxu0 %v324
    %v589 = vpop.f32.mrf.mxu0
    %v590 = vadd.f32 %v180, %v589
    %v591 = vpop.f32.mrf.mxu0
    %v592 = vadd.f32 %v180, %v591
    %593 = vmatmul.bf16.gmra.mxu0 %v325
    %v594 = vpop.f32.mrf.mxu0
    %v595 = vadd.f32 %v180, %v594
    %v596 = vpop.f32.mrf.mxu0
    %v597 = vadd.f32 %v180, %v596
    %598 = vmatmul.bf16.gmra.mxu0 %v326
    %v599 = vpop.f32.mrf.mxu0
    %v600 = vadd.f32 %v180, %v599
    %v601 = vpop.f32.mrf.mxu0
    %v602 = vadd.f32 %v180, %v601
    %603 = vmatmul.bf16.gmra.mxu0 %v327
    %v604 = vpop.f32.mrf.mxu0
    %v605 = vadd.f32 %v180, %v604
    %v606 = vpop.f32.mrf.mxu0
    %v607 = vadd.f32 %v180, %v606
    %608 = vmatmul.bf16.gmra.mxu0 %v328
    %v609 = vpop.f32.mrf.mxu0
    %v610 = vadd.f32 %v180, %v609
    %v611 = vpop.f32.mrf.mxu0
    %v612 = vadd.f32 %v180, %v611
    %613 = vmatmul.bf16.gmra.mxu0 %v329
    %v614 = vpop.f32.mrf.mxu0
    %v615 = vadd.f32 %v180, %v614
    %v616 = vpop.f32.mrf.mxu0
    %v617 = vadd.f32 %v180, %v616
    %618 = vmatmul.bf16.gmra.mxu0 %v330
    %v619 = vpop.f32.mrf.mxu0
    %v620 = vadd.f32 %v180, %v619
    %v621 = vpop.f32.mrf.mxu0
    %v622 = vadd.f32 %v180, %v621
    %623 = vmatmul.bf16.gmra.mxu0 %v331
    %v624 = vpop.f32.mrf.mxu0
    %v625 = vadd.f32 %v180, %v624
    %v626 = vpop.f32.mrf.mxu0
    %v627 = vadd.f32 %v180, %v626
    %628 = vmatmul.bf16.gmra.mxu0 %v332
    %v629 = vpop.f32.mrf.mxu0
    %v630 = vadd.f32 %v180, %v629
    %v631 = vpop.f32.mrf.mxu0
    %v632 = vadd.f32 %v180, %v631
    %633 = vmatmul.bf16.gmra.mxu0 %v333
    %v634 = vpop.f32.mrf.mxu0
    %v635 = vadd.f32 %v180, %v634
    %v636 = vpop.f32.mrf.mxu0
    %v637 = vadd.f32 %v180, %v636
    %638 = vmatmul.bf16.gmra.mxu0 %v334
    %v639 = vpop.f32.mrf.mxu0
    %v640 = vadd.f32 %v180, %v639
    %v641 = vpop.f32.mrf.mxu0
    %v642 = vadd.f32 %v180, %v641
    %643 = vmatmul.bf16.gmra.mxu0 %v335
    %v644 = vpop.f32.mrf.mxu0
    %v645 = vadd.f32 %v180, %v644
    %v646 = vpop.f32.mrf.mxu0
    %v647 = vadd.f32 %v180, %v646
    %648 = vmatmul.bf16.gmra.mxu0 %v336
    %v649 = vpop.f32.mrf.mxu0
    %v650 = vadd.f32 %v180, %v649
    %v651 = vpop.f32.mrf.mxu0
    %v652 = vadd.f32 %v180, %v651
    %653 = vmatmul.bf16.gmra.mxu0 %v337
    %v654 = vpop.f32.mrf.mxu0
    %v655 = vadd.f32 %v180, %v654
    %v656 = vpop.f32.mrf.mxu0
    %v657 = vadd.f32 %v180, %v656
    %658 = vmatmul.bf16.gmra.mxu0 %v338
    %v659 = vpop.f32.mrf.mxu0
    %v660 = vadd.f32 %v180, %v659
    %v661 = vpop.f32.mrf.mxu0
    %v662 = vadd.f32 %v180, %v661
    %663 = vmatmul.bf16.gmra.mxu0 %v339
    %v664 = vpop.f32.mrf.mxu0
    %v665 = vadd.f32 %v180, %v664
    %v666 = vpop.f32.mrf.mxu0
    %v667 = vadd.f32 %v180, %v666
    %668 = vmatmul.bf16.gmra.mxu0 %v340
    %v669 = vpop.f32.mrf.mxu0
    %v670 = vadd.f32 %v180, %v669
    %v671 = vpop.f32.mrf.mxu0
    %v672 = vadd.f32 %v180, %v671
    %673 = vmatmul.bf16.gmra.mxu0 %v341
    %v674 = vpop.f32.mrf.mxu0
    %v675 = vadd.f32 %v180, %v674
    %v676 = vpop.f32.mrf.mxu0
    %v677 = vadd.f32 %v180, %v676
    %678 = vmatmul.bf16.gmra.mxu0 %v342
    %v679 = vpop.f32.mrf.mxu0
    %v680 = vadd.f32 %v180, %v679
    %v681 = vpop.f32.mrf.mxu0
    %v682 = vadd.f32 %v180, %v681
    %683 = vmatmul.bf16.gmra.mxu0 %v343
    %v684 = vpop.f32.mrf.mxu0
    %v685 = vadd.f32 %v180, %v684
    %v686 = vpop.f32.mrf.mxu0
    %v687 = vadd.f32 %v180, %v686
    %688 = vmatmul.bf16.gmra.mxu0 %v344
    %v689 = vpop.f32.mrf.mxu0
    %v690 = vadd.f32 %v180, %v689
    %v691 = vpop.f32.mrf.mxu0
    %v692 = vadd.f32 %v180, %v691
    %693 = vmatmul.bf16.gmra.mxu0 %v345
    %v694 = vpop.f32.mrf.mxu0
    %v695 = vadd.f32 %v180, %v694
    %v696 = vpop.f32.mrf.mxu0
    %v697 = vadd.f32 %v180, %v696
    %698 = vmatmul.bf16.gmra.mxu0 %v346
    %v699 = vpop.f32.mrf.mxu0
    %v700 = vadd.f32 %v180, %v699
    %v701 = vpop.f32.mrf.mxu0
    %v702 = vadd.f32 %v180, %v701
    %703 = vmatmul.bf16.gmra.mxu0 %v347
    %v704 = vpop.f32.mrf.mxu0
    %v705 = vadd.f32 %v180, %v704
    %v706 = vpop.f32.mrf.mxu0
    %v707 = vadd.f32 %v180, %v706
    %708 = vdwg.mxu0
    %709 = vmatpush.bf16.msra.mxu0 %v505
    %710 = vmatpush.bf16.msra.mxu0 %v501
    %711 = vmatpush.bf16.msra.mxu0 %v497
    %712 = vmatpush.bf16.msra.mxu0 %v493
    %713 = vmatpush.bf16.msra.mxu0 %v489
    %714 = vmatpush.bf16.msra.mxu0 %v485
    %715 = vmatpush.bf16.msra.mxu0 %v481
    %716 = vmatpush.bf16.msra.mxu0 %v477
    %717 = vmatmul.bf16.gmra.mxu0 %v316
    %v718 = vpop.f32.mrf.mxu0
    %v719 = vadd.f32 %v181, %v718
    %v720 = vpop.f32.mrf.mxu0
    %v721 = vadd.f32 %v181, %v720
    %722 = vmatmul.bf16.gmra.mxu0 %v317
    %v723 = vpop.f32.mrf.mxu0
    %v724 = vadd.f32 %v181, %v723
    %v725 = vpop.f32.mrf.mxu0
    %v726 = vadd.f32 %v181, %v725
    %727 = vmatmul.bf16.gmra.mxu0 %v318
    %v728 = vpop.f32.mrf.mxu0
    %v729 = vadd.f32 %v181, %v728
    %v730 = vpop.f32.mrf.mxu0
    %v731 = vadd.f32 %v181, %v730
    %732 = vmatmul.bf16.gmra.mxu0 %v319
    %v733 = vpop.f32.mrf.mxu0
    %v734 = vadd.f32 %v181, %v733
    %v735 = vpop.f32.mrf.mxu0
    %v736 = vadd.f32 %v181, %v735
    %737 = vmatmul.bf16.gmra.mxu0 %v320
    %v738 = vpop.f32.mrf.mxu0
    %v739 = vadd.f32 %v181, %v738
    %v740 = vpop.f32.mrf.mxu0
    %v741 = vadd.f32 %v181, %v740
    %742 = vmatmul.bf16.gmra.mxu0 %v321
    %v743 = vpop.f32.mrf.mxu0
    %v744 = vadd.f32 %v181, %v743
    %v745 = vpop.f32.mrf.mxu0
    %v746 = vadd.f32 %v181, %v745
    %747 = vmatmul.bf16.gmra.mxu0 %v322
    %v748 = vpop.f32.mrf.mxu0
    %v749 = vadd.f32 %v181, %v748
    %v750 = vpop.f32.mrf.mxu0
    %v751 = vadd.f32 %v181, %v750
    %752 = vmatmul.bf16.gmra.mxu0 %v323
    %v753 = vpop.f32.mrf.mxu0
    %v754 = vadd.f32 %v181, %v753
    %v755 = vpop.f32.mrf.mxu0
    %v756 = vadd.f32 %v181, %v755
    %757 = vmatmul.bf16.gmra.mxu0 %v324
    %v758 = vpop.f32.mrf.mxu0
    %v759 = vadd.f32 %v181, %v758
    %v760 = vpop.f32.mrf.mxu0
    %v761 = vadd.f32 %v181, %v760
    %762 = vmatmul.bf16.gmra.mxu0 %v325
    %v763 = vpop.f32.mrf.mxu0
    %v764 = vadd.f32 %v181, %v763
    %v765 = vpop.f32.mrf.mxu0
    %v766 = vadd.f32 %v181, %v765
    %767 = vmatmul.bf16.gmra.mxu0 %v326
    %v768 = vpop.f32.mrf.mxu0
    %v769 = vadd.f32 %v181, %v768
    %v770 = vpop.f32.mrf.mxu0
    %v771 = vadd.f32 %v181, %v770
    %772 = vmatmul.bf16.gmra.mxu0 %v327
    %v773 = vpop.f32.mrf.mxu0
    %v774 = vadd.f32 %v181, %v773
    %v775 = vpop.f32.mrf.mxu0
    %v776 = vadd.f32 %v181, %v775
    %777 = vmatmul.bf16.gmra.mxu0 %v328
    %v778 = vpop.f32.mrf.mxu0
    %v779 = vadd.f32 %v181, %v778
    %v780 = vpop.f32.mrf.mxu0
    %v781 = vadd.f32 %v181, %v780
    %782 = vmatmul.bf16.gmra.mxu0 %v329
    %v783 = vpop.f32.mrf.mxu0
    %v784 = vadd.f32 %v181, %v783
    %v785 = vpop.f32.mrf.mxu0
    %v786 = vadd.f32 %v181, %v785
    %787 = vmatmul.bf16.gmra.mxu0 %v330
    %v788 = vpop.f32.mrf.mxu0
    %v789 = vadd.f32 %v181, %v788
    %v790 = vpop.f32.mrf.mxu0
    %v791 = vadd.f32 %v181, %v790
    %792 = vmatmul.bf16.gmra.mxu0 %v331
    %v793 = vpop.f32.mrf.mxu0
    %v794 = vadd.f32 %v181, %v793
    %v795 = vpop.f32.mrf.mxu0
    %v796 = vadd.f32 %v181, %v795
    %797 = vmatmul.bf16.gmra.mxu0 %v332
    %v798 = vpop.f32.mrf.mxu0
    %v799 = vadd.f32 %v181, %v798
    %v800 = vpop.f32.mrf.mxu0
    %v801 = vadd.f32 %v181, %v800
    %802 = vmatmul.bf16.gmra.mxu0 %v333
    %v803 = vpop.f32.mrf.mxu0
    %v804 = vadd.f32 %v181, %v803
    %v805 = vpop.f32.mrf.mxu0
    %v806 = vadd.f32 %v181, %v805
    %807 = vmatmul.bf16.gmra.mxu0 %v334
    %v808 = vpop.f32.mrf.mxu0
    %v809 = vadd.f32 %v181, %v808
    %v810 = vpop.f32.mrf.mxu0
    %v811 = vadd.f32 %v181, %v810
    %812 = vmatmul.bf16.gmra.mxu0 %v335
    %v813 = vpop.f32.mrf.mxu0
    %v814 = vadd.f32 %v181, %v813
    %v815 = vpop.f32.mrf.mxu0
    %v816 = vadd.f32 %v181, %v815
    %817 = vmatmul.bf16.gmra.mxu0 %v336
    %v818 = vpop.f32.mrf.mxu0
    %v819 = vadd.f32 %v181, %v818
    %v820 = vpop.f32.mrf.mxu0
    %v821 = vadd.f32 %v181, %v820
    %822 = vmatmul.bf16.gmra.mxu0 %v337
    %v823 = vpop.f32.mrf.mxu0
    %v824 = vadd.f32 %v181, %v823
    %v825 = vpop.f32.mrf.mxu0
    %v826 = vadd.f32 %v181, %v825
    %827 = vmatmul.bf16.gmra.mxu0 %v338
    %v828 = vpop.f32.mrf.mxu0
    %v829 = vadd.f32 %v181, %v828
    %v830 = vpop.f32.mrf.mxu0
    %v831 = vadd.f32 %v181, %v830
    %832 = vmatmul.bf16.gmra.mxu0 %v339
    %v833 = vpop.f32.mrf.mxu0
    %v834 = vadd.f32 %v181, %v833
    %v835 = vpop.f32.mrf.mxu0
    %v836 = vadd.f32 %v181, %v835
    %837 = vmatmul.bf16.gmra.mxu0 %v340
    %v838 = vpop.f32.mrf.mxu0
    %v839 = vadd.f32 %v181, %v838
    %v840 = vpop.f32.mrf.mxu0
    %v841 = vadd.f32 %v181, %v840
    %842 = vmatmul.bf16.gmra.mxu0 %v341
    %v843 = vpop.f32.mrf.mxu0
    %v844 = vadd.f32 %v181, %v843
    %v845 = vpop.f32.mrf.mxu0
    %v846 = vadd.f32 %v181, %v845
    %847 = vmatmul.bf16.gmra.mxu0 %v342
    %v848 = vpop.f32.mrf.mxu0
    %v849 = vadd.f32 %v181, %v848
    %v850 = vpop.f32.mrf.mxu0
    %v851 = vadd.f32 %v181, %v850
    %852 = vmatmul.bf16.gmra.mxu0 %v343
    %v853 = vpop.f32.mrf.mxu0
    %v854 = vadd.f32 %v181, %v853
    %v855 = vpop.f32.mrf.mxu0
    %v856 = vadd.f32 %v181, %v855
    %857 = vmatmul.bf16.gmra.mxu0 %v344
    %v858 = vpop.f32.mrf.mxu0
    %v859 = vadd.f32 %v181, %v858
    %v860 = vpop.f32.mrf.mxu0
    %v861 = vadd.f32 %v181, %v860
    %862 = vmatmul.bf16.gmra.mxu0 %v345
    %v863 = vpop.f32.mrf.mxu0
    %v864 = vadd.f32 %v181, %v863
    %v865 = vpop.f32.mrf.mxu0
    %v866 = vadd.f32 %v181, %v865
    %867 = vmatmul.bf16.gmra.mxu0 %v346
    %v868 = vpop.f32.mrf.mxu0
    %v869 = vadd.f32 %v181, %v868
    %v870 = vpop.f32.mrf.mxu0
    %v871 = vadd.f32 %v181, %v870
    %872 = vmatmul.bf16.gmra.mxu0 %v347
    %v873 = vpop.f32.mrf.mxu0
    %v874 = vadd.f32 %v181, %v873
    %v875 = vpop.f32.mrf.mxu0
    %v876 = vadd.f32 %v181, %v875
    %877 = vdwg.mxu0
    %878 = vmatpush.bf16.msra.mxu0 %v506
    %879 = vmatpush.bf16.msra.mxu0 %v502
    %880 = vmatpush.bf16.msra.mxu0 %v498
    %881 = vmatpush.bf16.msra.mxu0 %v494
    %882 = vmatpush.bf16.msra.mxu0 %v490
    %883 = vmatpush.bf16.msra.mxu0 %v486
    %884 = vmatpush.bf16.msra.mxu0 %v482
    %885 = vmatpush.bf16.msra.mxu0 %v478
    %886 = vmatmul.bf16.gmra.mxu0 %v316
    %v887 = vpop.f32.mrf.mxu0
    %v888 = vadd.f32 %v182, %v887
    %v889 = vpop.f32.mrf.mxu0
    %v890 = vadd.f32 %v182, %v889
    %891 = vmatmul.bf16.gmra.mxu0 %v317
    %v892 = vpop.f32.mrf.mxu0
    %v893 = vadd.f32 %v182, %v892
    %v894 = vpop.f32.mrf.mxu0
    %v895 = vadd.f32 %v182, %v894
    %896 = vmatmul.bf16.gmra.mxu0 %v318
    %v897 = vpop.f32.mrf.mxu0
    %v898 = vadd.f32 %v182, %v897
    %v899 = vpop.f32.mrf.mxu0
    %v900 = vadd.f32 %v182, %v899
    %901 = vmatmul.bf16.gmra.mxu0 %v319
    %v902 = vpop.f32.mrf.mxu0
    %v903 = vadd.f32 %v182, %v902
    %v904 = vpop.f32.mrf.mxu0
    %v905 = vadd.f32 %v182, %v904
    %906 = vmatmul.bf16.gmra.mxu0 %v320
    %v907 = vpop.f32.mrf.mxu0
    %v908 = vadd.f32 %v182, %v907
    %v909 = vpop.f32.mrf.mxu0
    %v910 = vadd.f32 %v182, %v909
    %911 = vmatmul.bf16.gmra.mxu0 %v321
    %v912 = vpop.f32.mrf.mxu0
    %v913 = vadd.f32 %v182, %v912
    %v914 = vpop.f32.mrf.mxu0
    %v915 = vadd.f32 %v182, %v914
    %916 = vmatmul.bf16.gmra.mxu0 %v322
    %v917 = vpop.f32.mrf.mxu0
    %v918 = vadd.f32 %v182, %v917
    %v919 = vpop.f32.mrf.mxu0
    %v920 = vadd.f32 %v182, %v919
    %921 = vmatmul.bf16.gmra.mxu0 %v323
    %v922 = vpop.f32.mrf.mxu0
    %v923 = vadd.f32 %v182, %v922
    %v924 = vpop.f32.mrf.mxu0
    %v925 = vadd.f32 %v182, %v924
    %926 = vmatmul.bf16.gmra.mxu0 %v324
    %v927 = vpop.f32.mrf.mxu0
    %v928 = vadd.f32 %v182, %v927
    %v929 = vpop.f32.mrf.mxu0
    %v930 = vadd.f32 %v182, %v929
    %931 = vmatmul.bf16.gmra.mxu0 %v325
    %v932 = vpop.f32.mrf.mxu0
    %v933 = vadd.f32 %v182, %v932
    %v934 = vpop.f32.mrf.mxu0
    %v935 = vadd.f32 %v182, %v934
    %936 = vmatmul.bf16.gmra.mxu0 %v326
    %v937 = vpop.f32.mrf.mxu0
    %v938 = vadd.f32 %v182, %v937
    %v939 = vpop.f32.mrf.mxu0
    %v940 = vadd.f32 %v182, %v939
    %941 = vmatmul.bf16.gmra.mxu0 %v327
    %v942 = vpop.f32.mrf.mxu0
    %v943 = vadd.f32 %v182, %v942
    %v944 = vpop.f32.mrf.mxu0
    %v945 = vadd.f32 %v182, %v944
    %946 = vmatmul.bf16.gmra.mxu0 %v328
    %v947 = vpop.f32.mrf.mxu0
    %v948 = vadd.f32 %v182, %v947
    %v949 = vpop.f32.mrf.mxu0
    %v950 = vadd.f32 %v182, %v949
    %951 = vmatmul.bf16.gmra.mxu0 %v329
    %v952 = vpop.f32.mrf.mxu0
    %v953 = vadd.f32 %v182, %v952
    %v954 = vpop.f32.mrf.mxu0
    %v955 = vadd.f32 %v182, %v954
    %956 = vmatmul.bf16.gmra.mxu0 %v330
    %v957 = vpop.f32.mrf.mxu0
    %v958 = vadd.f32 %v182, %v957
    %v959 = vpop.f32.mrf.mxu0
    %v960 = vadd.f32 %v182, %v959
    %961 = vmatmul.bf16.gmra.mxu0 %v331
    %v962 = vpop.f32.mrf.mxu0
    %v963 = vadd.f32 %v182, %v962
    %v964 = vpop.f32.mrf.mxu0
    %v965 = vadd.f32 %v182, %v964
    %966 = vmatmul.bf16.gmra.mxu0 %v332
    %v967 = vpop.f32.mrf.mxu0
    %v968 = vadd.f32 %v182, %v967
    %v969 = vpop.f32.mrf.mxu0
    %v970 = vadd.f32 %v182, %v969
    %971 = vmatmul.bf16.gmra.mxu0 %v333
    %v972 = vpop.f32.mrf.mxu0
    %v973 = vadd.f32 %v182, %v972
    %v974 = vpop.f32.mrf.mxu0
    %v975 = vadd.f32 %v182, %v974
    %976 = vmatmul.bf16.gmra.mxu0 %v334
    %v977 = vpop.f32.mrf.mxu0
    %v978 = vadd.f32 %v182, %v977
    %v979 = vpop.f32.mrf.mxu0
    %v980 = vadd.f32 %v182, %v979
    %981 = vmatmul.bf16.gmra.mxu0 %v335
    %v982 = vpop.f32.mrf.mxu0
    %v983 = vadd.f32 %v182, %v982
    %v984 = vpop.f32.mrf.mxu0
    %v985 = vadd.f32 %v182, %v984
    %986 = vmatmul.bf16.gmra.mxu0 %v336
    %v987 = vpop.f32.mrf.mxu0
    %v988 = vadd.f32 %v182, %v987
    %v989 = vpop.f32.mrf.mxu0
    %v990 = vadd.f32 %v182, %v989
    %991 = vmatmul.bf16.gmra.mxu0 %v337
    %v992 = vpop.f32.mrf.mxu0
    %v993 = vadd.f32 %v182, %v992
    %v994 = vpop.f32.mrf.mxu0
    %v995 = vadd.f32 %v182, %v994
    %996 = vmatmul.bf16.gmra.mxu0 %v338
    %v997 = vpop.f32.mrf.mxu0
    %v998 = vadd.f32 %v182, %v997
    %v999 = vpop.f32.mrf.mxu0
    %v1000 = vadd.f32 %v182, %v999
    %1001 = vmatmul.bf16.gmra.mxu0 %v339
    %v1002 = vpop.f32.mrf.mxu0
    %v1003 = vadd.f32 %v182, %v1002
    %v1004 = vpop.f32.mrf.mxu0
    %v1005 = vadd.f32 %v182, %v1004
    %1006 = vmatmul.bf16.gmra.mxu0 %v340
    %v1007 = vpop.f32.mrf.mxu0
    %v1008 = vadd.f32 %v182, %v1007
    %v1009 = vpop.f32.mrf.mxu0
    %v1010 = vadd.f32 %v182, %v1009
    %1011 = vmatmul.bf16.gmra.mxu0 %v341
    %v1012 = vpop.f32.mrf.mxu0
    %v1013 = vadd.f32 %v182, %v1012
    %v1014 = vpop.f32.mrf.mxu0
    %v1015 = vadd.f32 %v182, %v1014
    %1016 = vmatmul.bf16.gmra.mxu0 %v342
    %v1017 = vpop.f32.mrf.mxu0
    %v1018 = vadd.f32 %v182, %v1017
    %v1019 = vpop.f32.mrf.mxu0
    %v1020 = vadd.f32 %v182, %v1019
    %1021 = vmatmul.bf16.gmra.mxu0 %v343
    %v1022 = vpop.f32.mrf.mxu0
    %v1023 = vadd.f32 %v182, %v1022
    %v1024 = vpop.f32.mrf.mxu0
    %v1025 = vadd.f32 %v182, %v1024
    %1026 = vmatmul.bf16.gmra.mxu0 %v344
    %v1027 = vpop.f32.mrf.mxu0
    %v1028 = vadd.f32 %v182, %v1027
    %v1029 = vpop.f32.mrf.mxu0
    %v1030 = vadd.f32 %v182, %v1029
    %1031 = vmatmul.bf16.gmra.mxu0 %v345
    %v1032 = vpop.f32.mrf.mxu0
    %v1033 = vadd.f32 %v182, %v1032
    %v1034 = vpop.f32.mrf.mxu0
    %v1035 = vadd.f32 %v182, %v1034
    %1036 = vmatmul.bf16.gmra.mxu0 %v346
    %v1037 = vpop.f32.mrf.mxu0
    %v1038 = vadd.f32 %v182, %v1037
    %v1039 = vpop.f32.mrf.mxu0
    %v1040 = vadd.f32 %v182, %v1039
    %1041 = vmatmul.bf16.gmra.mxu0 %v347
    %v1042 = vpop.f32.mrf.mxu0
    %v1043 = vadd.f32 %v182, %v1042
    %v1044 = vpop.f32.mrf.mxu0
    %v1045 = vadd.f32 %v182, %v1044
    %1046 = vdwg.mxu0
    %1047 = vmatpush.bf16.msra.mxu0 %v507
    %1048 = vmatpush.bf16.msra.mxu0 %v503
    %1049 = vmatpush.bf16.msra.mxu0 %v499
    %1050 = vmatpush.bf16.msra.mxu0 %v495
    %1051 = vmatpush.bf16.msra.mxu0 %v491
    %1052 = vmatpush.bf16.msra.mxu0 %v487
    %1053 = vmatpush.bf16.msra.mxu0 %v483
    %1054 = vmatpush.bf16.msra.mxu0 %v479
    %1055 = vmatmul.bf16.gmra.mxu0 %v316
    %v1056 = vpop.f32.mrf.mxu0
    %v1057 = vadd.f32 %v183, %v1056
    %v1058 = vpop.f32.mrf.mxu0
    %v1059 = vadd.f32 %v183, %v1058
    %1060 = vmatmul.bf16.gmra.mxu0 %v317
    %v1061 = vpop.f32.mrf.mxu0
    %v1062 = vadd.f32 %v183, %v1061
    %v1063 = vpop.f32.mrf.mxu0
    %v1064 = vadd.f32 %v183, %v1063
    %1065 = vmatmul.bf16.gmra.mxu0 %v318
    %v1066 = vpop.f32.mrf.mxu0
    %v1067 = vadd.f32 %v183, %v1066
    %v1068 = vpop.f32.mrf.mxu0
    %v1069 = vadd.f32 %v183, %v1068
    %1070 = vmatmul.bf16.gmra.mxu0 %v319
    %v1071 = vpop.f32.mrf.mxu0
    %v1072 = vadd.f32 %v183, %v1071
    %v1073 = vpop.f32.mrf.mxu0
    %v1074 = vadd.f32 %v183, %v1073
    %1075 = vmatmul.bf16.gmra.mxu0 %v320
    %v1076 = vpop.f32.mrf.mxu0
    %v1077 = vadd.f32 %v183, %v1076
    %v1078 = vpop.f32.mrf.mxu0
    %v1079 = vadd.f32 %v183, %v1078
    %1080 = vmatmul.bf16.gmra.mxu0 %v321
    %v1081 = vpop.f32.mrf.mxu0
    %v1082 = vadd.f32 %v183, %v1081
    %v1083 = vpop.f32.mrf.mxu0
    %v1084 = vadd.f32 %v183, %v1083
    %1085 = vmatmul.bf16.gmra.mxu0 %v322
    %v1086 = vpop.f32.mrf.mxu0
    %v1087 = vadd.f32 %v183, %v1086
    %v1088 = vpop.f32.mrf.mxu0
    %v1089 = vadd.f32 %v183, %v1088
    %1090 = vmatmul.bf16.gmra.mxu0 %v323
    %v1091 = vpop.f32.mrf.mxu0
    %v1092 = vadd.f32 %v183, %v1091
    %v1093 = vpop.f32.mrf.mxu0
    %v1094 = vadd.f32 %v183, %v1093
    %1095 = vmatmul.bf16.gmra.mxu0 %v324
    %v1096 = vpop.f32.mrf.mxu0
    %v1097 = vadd.f32 %v183, %v1096
    %v1098 = vpop.f32.mrf.mxu0
    %v1099 = vadd.f32 %v183, %v1098
    %1100 = vmatmul.bf16.gmra.mxu0 %v325
    %v1101 = vpop.f32.mrf.mxu0
    %v1102 = vadd.f32 %v183, %v1101
    %v1103 = vpop.f32.mrf.mxu0
    %v1104 = vadd.f32 %v183, %v1103
    %1105 = vmatmul.bf16.gmra.mxu0 %v326
    %v1106 = vpop.f32.mrf.mxu0
    %v1107 = vadd.f32 %v183, %v1106
    %v1108 = vpop.f32.mrf.mxu0
    %v1109 = vadd.f32 %v183, %v1108
    %1110 = vmatmul.bf16.gmra.mxu0 %v327
    %v1111 = vpop.f32.mrf.mxu0
    %v1112 = vadd.f32 %v183, %v1111
    %v1113 = vpop.f32.mrf.mxu0
    %v1114 = vadd.f32 %v183, %v1113
    %1115 = vmatmul.bf16.gmra.mxu0 %v328
    %v1116 = vpop.f32.mrf.mxu0
    %v1117 = vadd.f32 %v183, %v1116
    %v1118 = vpop.f32.mrf.mxu0
    %v1119 = vadd.f32 %v183, %v1118
    %1120 = vmatmul.bf16.gmra.mxu0 %v329
    %v1121 = vpop.f32.mrf.mxu0
    %v1122 = vadd.f32 %v183, %v1121
    %v1123 = vpop.f32.mrf.mxu0
    %v1124 = vadd.f32 %v183, %v1123
    %1125 = vmatmul.bf16.gmra.mxu0 %v330
    %v1126 = vpop.f32.mrf.mxu0
    %v1127 = vadd.f32 %v183, %v1126
    %v1128 = vpop.f32.mrf.mxu0
    %v1129 = vadd.f32 %v183, %v1128
    %1130 = vmatmul.bf16.gmra.mxu0 %v331
    %v1131 = vpop.f32.mrf.mxu0
    %v1132 = vadd.f32 %v183, %v1131
    %v1133 = vpop.f32.mrf.mxu0
    %v1134 = vadd.f32 %v183, %v1133
    %1135 = vmatmul.bf16.gmra.mxu0 %v332
    %v1136 = vpop.f32.mrf.mxu0
    %v1137 = vadd.f32 %v183, %v1136
    %v1138 = vpop.f32.mrf.mxu0
    %v1139 = vadd.f32 %v183, %v1138
    %1140 = vmatmul.bf16.gmra.mxu0 %v333
    %v1141 = vpop.f32.mrf.mxu0
    %v1142 = vadd.f32 %v183, %v1141
    %v1143 = vpop.f32.mrf.mxu0
    %v1144 = vadd.f32 %v183, %v1143
    %1145 = vmatmul.bf16.gmra.mxu0 %v334
    %v1146 = vpop.f32.mrf.mxu0
    %v1147 = vadd.f32 %v183, %v1146
    %v1148 = vpop.f32.mrf.mxu0
    %v1149 = vadd.f32 %v183, %v1148
    %1150 = vmatmul.bf16.gmra.mxu0 %v335
    %v1151 = vpop.f32.mrf.mxu0
    %v1152 = vadd.f32 %v183, %v1151
    %v1153 = vpop.f32.mrf.mxu0
    %v1154 = vadd.f32 %v183, %v1153
    %1155 = vmatmul.bf16.gmra.mxu0 %v336
    %v1156 = vpop.f32.mrf.mxu0
    %v1157 = vadd.f32 %v183, %v1156
    %v1158 = vpop.f32.mrf.mxu0
    %v1159 = vadd.f32 %v183, %v1158
    %1160 = vmatmul.bf16.gmra.mxu0 %v337
    %v1161 = vpop.f32.mrf.mxu0
    %v1162 = vadd.f32 %v183, %v1161
    %v1163 = vpop.f32.mrf.mxu0
    %v1164 = vadd.f32 %v183, %v1163
    %1165 = vmatmul.bf16.gmra.mxu0 %v338
    %v1166 = vpop.f32.mrf.mxu0
    %v1167 = vadd.f32 %v183, %v1166
    %v1168 = vpop.f32.mrf.mxu0
    %v1169 = vadd.f32 %v183, %v1168
    %1170 = vmatmul.bf16.gmra.mxu0 %v339
    %v1171 = vpop.f32.mrf.mxu0
    %v1172 = vadd.f32 %v183, %v1171
    %v1173 = vpop.f32.mrf.mxu0
    %v1174 = vadd.f32 %v183, %v1173
    %1175 = vmatmul.bf16.gmra.mxu0 %v340
    %v1176 = vpop.f32.mrf.mxu0
    %v1177 = vadd.f32 %v183, %v1176
    %v1178 = vpop.f32.mrf.mxu0
    %v1179 = vadd.f32 %v183, %v1178
    %1180 = vmatmul.bf16.gmra.mxu0 %v341
    %v1181 = vpop.f32.mrf.mxu0
    %v1182 = vadd.f32 %v183, %v1181
    %v1183 = vpop.f32.mrf.mxu0
    %v1184 = vadd.f32 %v183, %v1183
    %1185 = vmatmul.bf16.gmra.mxu0 %v342
    %v1186 = vpop.f32.mrf.mxu0
    %v1187 = vadd.f32 %v183, %v1186
    %v1188 = vpop.f32.mrf.mxu0
    %v1189 = vadd.f32 %v183, %v1188
    %1190 = vmatmul.bf16.gmra.mxu0 %v343
    %v1191 = vpop.f32.mrf.mxu0
    %v1192 = vadd.f32 %v183, %v1191
    %v1193 = vpop.f32.mrf.mxu0
    %v1194 = vadd.f32 %v183, %v1193
    %1195 = vmatmul.bf16.gmra.mxu0 %v344
    %v1196 = vpop.f32.mrf.mxu0
    %v1197 = vadd.f32 %v183, %v1196
    %v1198 = vpop.f32.mrf.mxu0
    %v1199 = vadd.f32 %v183, %v1198
    %1200 = vmatmul.bf16.gmra.mxu0 %v345
    %v1201 = vpop.f32.mrf.mxu0
    %v1202 = vadd.f32 %v183, %v1201
    %v1203 = vpop.f32.mrf.mxu0
    %v1204 = vadd.f32 %v183, %v1203
    %1205 = vmatmul.bf16.gmra.mxu0 %v346
    %v1206 = vpop.f32.mrf.mxu0
    %v1207 = vadd.f32 %v183, %v1206
    %v1208 = vpop.f32.mrf.mxu0
    %v1209 = vadd.f32 %v183, %v1208
    %1210 = vmatmul.bf16.gmra.mxu0 %v347
    %v1211 = vpop.f32.mrf.mxu0
    %v1212 = vadd.f32 %v183, %v1211
    %v1213 = vpop.f32.mrf.mxu0
    %v1214 = vadd.f32 %v183, %v1213
    %1215 = vdwg.mxu0
    %v1216 = vmax.f32 %v550, 0.0
    %v1217 = vmax.f32 %v719, 0.0
    %v1218 = vmax.f32 %v888, 0.0
    %v1219 = vmax.f32 %v1057, 0.0
    %v1220 = vmax.f32 %v552, 0.0
    %v1221 = vmax.f32 %v721, 0.0
    %v1222 = vmax.f32 %v890, 0.0
    %v1223 = vmax.f32 %v1059, 0.0
    %v1224 = vmax.f32 %v555, 0.0
    %v1225 = vmax.f32 %v724, 0.0
    %v1226 = vmax.f32 %v893, 0.0
    %v1227 = vmax.f32 %v1062, 0.0
    %v1228 = vmax.f32 %v557, 0.0
    %v1229 = vmax.f32 %v726, 0.0
    %v1230 = vmax.f32 %v895, 0.0
    %v1231 = vmax.f32 %v1064, 0.0
    %v1232 = vmax.f32 %v560, 0.0
    %v1233 = vmax.f32 %v729, 0.0
    %v1234 = vmax.f32 %v898, 0.0
    %v1235 = vmax.f32 %v1067, 0.0
    %v1236 = vmax.f32 %v562, 0.0
    %v1237 = vmax.f32 %v731, 0.0
    %v1238 = vmax.f32 %v900, 0.0
    %v1239 = vmax.f32 %v1069, 0.0
    %v1240 = vmax.f32 %v565, 0.0
    %v1241 = vmax.f32 %v734, 0.0
    %v1242 = vmax.f32 %v903, 0.0
    %v1243 = vmax.f32 %v1072, 0.0
    %v1244 = vmax.f32 %v567, 0.0
    %v1245 = vmax.f32 %v736, 0.0
    %v1246 = vmax.f32 %v905, 0.0
    %v1247 = vmax.f32 %v1074, 0.0
    %v1248 = vmax.f32 %v570, 0.0
    %v1249 = vmax.f32 %v739, 0.0
    %v1250 = vmax.f32 %v908, 0.0
    %v1251 = vmax.f32 %v1077, 0.0
    %v1252 = vmax.f32 %v572, 0.0
    %v1253 = vmax.f32 %v741, 0.0
    %v1254 = vmax.f32 %v910, 0.0
    %v1255 = vmax.f32 %v1079, 0.0
    %v1256 = vmax.f32 %v575, 0.0
    %v1257 = vmax.f32 %v744, 0.0
    %v1258 = vmax.f32 %v913, 0.0
    %v1259 = vmax.f32 %v1082, 0.0
    %v1260 = vmax.f32 %v577, 0.0
    %v1261 = vmax.f32 %v746, 0.0
    %v1262 = vmax.f32 %v915, 0.0
    %v1263 = vmax.f32 %v1084, 0.0
    %v1264 = vmax.f32 %v580, 0.0
    %v1265 = vmax.f32 %v749, 0.0
    %v1266 = vmax.f32 %v918, 0.0
    %v1267 = vmax.f32 %v1087, 0.0
    %v1268 = vmax.f32 %v582, 0.0
    %v1269 = vmax.f32 %v751, 0.0
    %v1270 = vmax.f32 %v920, 0.0
    %v1271 = vmax.f32 %v1089, 0.0
    %v1272 = vmax.f32 %v585, 0.0
    %v1273 = vmax.f32 %v754, 0.0
    %v1274 = vmax.f32 %v923, 0.0
    %v1275 = vmax.f32 %v1092, 0.0
    %v1276 = vmax.f32 %v587, 0.0
    %v1277 = vmax.f32 %v756, 0.0
    %v1278 = vmax.f32 %v925, 0.0
    %v1279 = vmax.f32 %v1094, 0.0
    %v1280 = vmax.f32 %v590, 0.0
    %v1281 = vmax.f32 %v759, 0.0
    %v1282 = vmax.f32 %v928, 0.0
    %v1283 = vmax.f32 %v1097, 0.0
    %v1284 = vmax.f32 %v592, 0.0
    %v1285 = vmax.f32 %v761, 0.0
    %v1286 = vmax.f32 %v930, 0.0
    %v1287 = vmax.f32 %v1099, 0.0
    %v1288 = vmax.f32 %v595, 0.0
    %v1289 = vmax.f32 %v764, 0.0
    %v1290 = vmax.f32 %v933, 0.0
    %v1291 = vmax.f32 %v1102, 0.0
    %v1292 = vmax.f32 %v597, 0.0
    %v1293 = vmax.f32 %v766, 0.0
    %v1294 = vmax.f32 %v935, 0.0
    %v1295 = vmax.f32 %v1104, 0.0
    %v1296 = vmax.f32 %v600, 0.0
    %v1297 = vmax.f32 %v769, 0.0
    %v1298 = vmax.f32 %v938, 0.0
    %v1299 = vmax.f32 %v1107, 0.0
    %v1300 = vmax.f32 %v602, 0.0
    %v1301 = vmax.f32 %v771, 0.0
    %v1302 = vmax.f32 %v940, 0.0
    %v1303 = vmax.f32 %v1109, 0.0
    %v1304 = vmax.f32 %v605, 0.0
    %v1305 = vmax.f32 %v774, 0.0
    %v1306 = vmax.f32 %v943, 0.0
    %v1307 = vmax.f32 %v1112, 0.0
    %v1308 = vmax.f32 %v607, 0.0
    %v1309 = vmax.f32 %v776, 0.0
    %v1310 = vmax.f32 %v945, 0.0
    %v1311 = vmax.f32 %v1114, 0.0
    %v1312 = vmax.f32 %v610, 0.0
    %v1313 = vmax.f32 %v779, 0.0
    %v1314 = vmax.f32 %v948, 0.0
    %v1315 = vmax.f32 %v1117, 0.0
    %v1316 = vmax.f32 %v612, 0.0
    %v1317 = vmax.f32 %v781, 0.0
    %v1318 = vmax.f32 %v950, 0.0
    %v1319 = vmax.f32 %v1119, 0.0
    %v1320 = vmax.f32 %v615, 0.0
    %v1321 = vmax.f32 %v784, 0.0
    %v1322 = vmax.f32 %v953, 0.0
    %v1323 = vmax.f32 %v1122, 0.0
    %v1324 = vmax.f32 %v617, 0.0
    %v1325 = vmax.f32 %v786, 0.0
    %v1326 = vmax.f32 %v955, 0.0
    %v1327 = vmax.f32 %v1124, 0.0
    %v1328 = vmax.f32 %v620, 0.0
    %v1329 = vmax.f32 %v789, 0.0
    %v1330 = vmax.f32 %v958, 0.0
    %v1331 = vmax.f32 %v1127, 0.0
    %v1332 = vmax.f32 %v622, 0.0
    %v1333 = vmax.f32 %v791, 0.0
    %v1334 = vmax.f32 %v960, 0.0
    %v1335 = vmax.f32 %v1129, 0.0
    %v1336 = vmax.f32 %v625, 0.0
    %v1337 = vmax.f32 %v794, 0.0
    %v1338 = vmax.f32 %v963, 0.0
    %v1339 = vmax.f32 %v1132, 0.0
    %v1340 = vmax.f32 %v627, 0.0
    %v1341 = vmax.f32 %v796, 0.0
    %v1342 = vmax.f32 %v965, 0.0
    %v1343 = vmax.f32 %v1134, 0.0
    %v1344 = vmax.f32 %v630, 0.0
    %v1345 = vmax.f32 %v799, 0.0
    %v1346 = vmax.f32 %v968, 0.0
    %v1347 = vmax.f32 %v1137, 0.0
    %v1348 = vmax.f32 %v632, 0.0
    %v1349 = vmax.f32 %v801, 0.0
    %v1350 = vmax.f32 %v970, 0.0
    %v1351 = vmax.f32 %v1139, 0.0
    %v1352 = vmax.f32 %v635, 0.0
    %v1353 = vmax.f32 %v804, 0.0
    %v1354 = vmax.f32 %v973, 0.0
    %v1355 = vmax.f32 %v1142, 0.0
    %v1356 = vmax.f32 %v637, 0.0
    %v1357 = vmax.f32 %v806, 0.0
    %v1358 = vmax.f32 %v975, 0.0
    %v1359 = vmax.f32 %v1144, 0.0
    %v1360 = vmax.f32 %v640, 0.0
    %v1361 = vmax.f32 %v809, 0.0
    %v1362 = vmax.f32 %v978, 0.0
    %v1363 = vmax.f32 %v1147, 0.0
    %v1364 = vmax.f32 %v642, 0.0
    %v1365 = vmax.f32 %v811, 0.0
    %v1366 = vmax.f32 %v980, 0.0
    %v1367 = vmax.f32 %v1149, 0.0
    %v1368 = vmax.f32 %v645, 0.0
    %v1369 = vmax.f32 %v814, 0.0
    %v1370 = vmax.f32 %v983, 0.0
    %v1371 = vmax.f32 %v1152, 0.0
    %v1372 = vmax.f32 %v647, 0.0
    %v1373 = vmax.f32 %v816, 0.0
    %v1374 = vmax.f32 %v985, 0.0
    %v1375 = vmax.f32 %v1154, 0.0
    %v1376 = vmax.f32 %v650, 0.0
    %v1377 = vmax.f32 %v819, 0.0
    %v1378 = vmax.f32 %v988, 0.0
    %v1379 = vmax.f32 %v1157, 0.0
    %v1380 = vmax.f32 %v652, 0.0
    %v1381 = vmax.f32 %v821, 0.0
    %v1382 = vmax.f32 %v990, 0.0
    %v1383 = vmax.f32 %v1159, 0.0
    %v1384 = vmax.f32 %v655, 0.0
    %v1385 = vmax.f32 %v824, 0.0
    %v1386 = vmax.f32 %v993, 0.0
    %v1387 = vmax.f32 %v1162, 0.0
    %v1388 = vmax.f32 %v657, 0.0
    %v1389 = vmax.f32 %v826, 0.0
    %v1390 = vmax.f32 %v995, 0.0
    %v1391 = vmax.f32 %v1164, 0.0
    %v1392 = vmax.f32 %v660, 0.0
    %v1393 = vmax.f32 %v829, 0.0
    %v1394 = vmax.f32 %v998, 0.0
    %v1395 = vmax.f32 %v1167, 0.0
    %v1396 = vmax.f32 %v662, 0.0
    %v1397 = vmax.f32 %v831, 0.0
    %v1398 = vmax.f32 %v1000, 0.0
    %v1399 = vmax.f32 %v1169, 0.0
    %v1400 = vmax.f32 %v665, 0.0
    %v1401 = vmax.f32 %v834, 0.0
    %v1402 = vmax.f32 %v1003, 0.0
    %v1403 = vmax.f32 %v1172, 0.0
    %v1404 = vmax.f32 %v667, 0.0
    %v1405 = vmax.f32 %v836, 0.0
    %v1406 = vmax.f32 %v1005, 0.0
    %v1407 = vmax.f32 %v1174, 0.0
    %v1408 = vmax.f32 %v670, 0.0
    %v1409 = vmax.f32 %v839, 0.0
    %v1410 = vmax.f32 %v1008, 0.0
    %v1411 = vmax.f32 %v1177, 0.0
    %v1412 = vmax.f32 %v672, 0.0
    %v1413 = vmax.f32 %v841, 0.0
    %v1414 = vmax.f32 %v1010, 0.0
    %v1415 = vmax.f32 %v1179, 0.0
    %v1416 = vmax.f32 %v675, 0.0
    %v1417 = vmax.f32 %v844, 0.0
    %v1418 = vmax.f32 %v1013, 0.0
    %v1419 = vmax.f32 %v1182, 0.0
    %v1420 = vmax.f32 %v677, 0.0
    %v1421 = vmax.f32 %v846, 0.0
    %v1422 = vmax.f32 %v1015, 0.0
    %v1423 = vmax.f32 %v1184, 0.0
    %v1424 = vmax.f32 %v680, 0.0
    %v1425 = vmax.f32 %v849, 0.0
    %v1426 = vmax.f32 %v1018, 0.0
    %v1427 = vmax.f32 %v1187, 0.0
    %v1428 = vmax.f32 %v682, 0.0
    %v1429 = vmax.f32 %v851, 0.0
    %v1430 = vmax.f32 %v1020, 0.0
    %v1431 = vmax.f32 %v1189, 0.0
    %v1432 = vmax.f32 %v685, 0.0
    %v1433 = vmax.f32 %v854, 0.0
    %v1434 = vmax.f32 %v1023, 0.0
    %v1435 = vmax.f32 %v1192, 0.0
    %v1436 = vmax.f32 %v687, 0.0
    %v1437 = vmax.f32 %v856, 0.0
    %v1438 = vmax.f32 %v1025, 0.0
    %v1439 = vmax.f32 %v1194, 0.0
    %v1440 = vmax.f32 %v690, 0.0
    %v1441 = vmax.f32 %v859, 0.0
    %v1442 = vmax.f32 %v1028, 0.0
    %v1443 = vmax.f32 %v1197, 0.0
    %v1444 = vmax.f32 %v692, 0.0
    %v1445 = vmax.f32 %v861, 0.0
    %v1446 = vmax.f32 %v1030, 0.0
    %v1447 = vmax.f32 %v1199, 0.0
    %v1448 = vmax.f32 %v695, 0.0
    %v1449 = vmax.f32 %v864, 0.0
    %v1450 = vmax.f32 %v1033, 0.0
    %v1451 = vmax.f32 %v1202, 0.0
    %v1452 = vmax.f32 %v697, 0.0
    %v1453 = vmax.f32 %v866, 0.0
    %v1454 = vmax.f32 %v1035, 0.0
    %v1455 = vmax.f32 %v1204, 0.0
    %v1456 = vmax.f32 %v700, 0.0
    %v1457 = vmax.f32 %v869, 0.0
    %v1458 = vmax.f32 %v1038, 0.0
    %v1459 = vmax.f32 %v1207, 0.0
    %v1460 = vmax.f32 %v702, 0.0
    %v1461 = vmax.f32 %v871, 0.0
    %v1462 = vmax.f32 %v1040, 0.0
    %v1463 = vmax.f32 %v1209, 0.0
    %v1464 = vmax.f32 %v705, 0.0
    %v1465 = vmax.f32 %v874, 0.0
    %v1466 = vmax.f32 %v1043, 0.0
    %v1467 = vmax.f32 %v1212, 0.0
    %v1468 = vmax.f32 %v707, 0.0
    %v1469 = vmax.f32 %v876, 0.0
    %v1470 = vmax.f32 %v1045, 0.0
    %v1471 = vmax.f32 %v1214, 0.0
    %v1472 = vlaneseq
    %v1473 = vshrl.u32 %v1472, 7
    %v1474 = vlaneseq
    %v1475 = vand.u32 %v1474, 127
    %v1476 = vadd.s32 %v1475, 128
    %v1477 = vadd.s32 %v1475, 256
    %v1478 = vadd.s32 %v1475, 384
    %v1479 = vmul.u32 %v1473, 256
    %vm1480 = vcmp.ge.s32.totalorder %v1475, %v1479
    %vm1481 = vcmp.ge.s32.totalorder %v1476, %v1479
    %vm1482 = vcmp.ge.s32.totalorder %v1477, %v1479
    %vm1483 = vcmp.ge.s32.totalorder %v1478, %v1479
    %v1484 = vadd.s32 %v1473, 1
    %v1485 = vmul.u32 %v1484, 256
    %vm1486 = vcmp.lt.s32.totalorder %v1475, %v1485
    %vm1487 = vcmp.lt.s32.totalorder %v1476, %v1485
    %vm1488 = vcmp.lt.s32.totalorder %v1477, %v1485
    %vm1489 = vcmp.lt.s32.totalorder %v1478, %v1485
    %vm1490 = vmand %vm1480, %vm1486
    %vm1491 = vmand %vm1481, %vm1487
    %vm1492 = vmand %vm1482, %vm1488
    %vm1493 = vmand %vm1483, %vm1489
    %v1494 = vsel %vm1490, 0.00390625, 0.0
    %v1495 = vsel %vm1491, 0.00390625, 0.0
    %v1496 = vsel %vm1492, 0.00390625, 0.0
    %v1497 = vsel %vm1493, 0.00390625, 0.0
    %1498 = vmatpush.msra.mxu0 %v1276
    %1499 = vmatpush.msra.mxu0 %v1272
    %1500 = vmatpush.msra.mxu0 %v1268
    %1501 = vmatpush.msra.mxu0 %v1264
    %1502 = vmatpush.msra.mxu0 %v1260
    %1503 = vmatpush.msra.mxu0 %v1256
    %1504 = vmatpush.msra.mxu0 %v1252
    %1505 = vmatpush.msra.mxu0 %v1248
    %1506 = vmatpush.msra.mxu0 %v1244
    %1507 = vmatpush.msra.mxu0 %v1240
    %1508 = vmatpush.msra.mxu0 %v1236
    %1509 = vmatpush.msra.mxu0 %v1232
    %1510 = vmatpush.msra.mxu0 %v1228
    %1511 = vmatpush.msra.mxu0 %v1224
    %1512 = vmatpush.msra.mxu0 %v1220
    %1513 = vmatpush.msra.mxu0 %v1216
    %1514 = vmatmul.f32.gmra.mxu0 %v1494
    %v1515 = vpop.f32.mrf.mxu0
    %v1516 = vadd.f32 0.0, %v1515
    %1517 = vdwg.mxu0
    %1518 = vmatpush.msra.mxu0 %v1340
    %1519 = vmatpush.msra.mxu0 %v1336
    %1520 = vmatpush.msra.mxu0 %v1332
    %1521 = vmatpush.msra.mxu0 %v1328
    %1522 = vmatpush.msra.mxu0 %v1324
    %1523 = vmatpush.msra.mxu0 %v1320
    %1524 = vmatpush.msra.mxu0 %v1316
    %1525 = vmatpush.msra.mxu0 %v1312
    %1526 = vmatpush.msra.mxu0 %v1308
    %1527 = vmatpush.msra.mxu0 %v1304
    %1528 = vmatpush.msra.mxu0 %v1300
    %1529 = vmatpush.msra.mxu0 %v1296
    %1530 = vmatpush.msra.mxu0 %v1292
    %1531 = vmatpush.msra.mxu0 %v1288
    %1532 = vmatpush.msra.mxu0 %v1284
    %1533 = vmatpush.msra.mxu0 %v1280
    %1534 = vmatmul.f32.gmra.mxu0 %v1495
    %v1535 = vpop.f32.mrf.mxu0
    %v1536 = vadd.f32 %v1516, %v1535
    %1537 = vdwg.mxu0
    %1538 = vmatpush.msra.mxu0 %v1404
    %1539 = vmatpush.msra.mxu0 %v1400
    %1540 = vmatpush.msra.mxu0 %v1396
    %1541 = vmatpush.msra.mxu0 %v1392
    %1542 = vmatpush.msra.mxu0 %v1388
    %1543 = vmatpush.msra.mxu0 %v1384
    %1544 = vmatpush.msra.mxu0 %v1380
    %1545 = vmatpush.msra.mxu0 %v1376
    %1546 = vmatpush.msra.mxu0 %v1372
    %1547 = vmatpush.msra.mxu0 %v1368
    %1548 = vmatpush.msra.mxu0 %v1364
    %1549 = vmatpush.msra.mxu0 %v1360
    %1550 = vmatpush.msra.mxu0 %v1356
    %1551 = vmatpush.msra.mxu0 %v1352
    %1552 = vmatpush.msra.mxu0 %v1348
    %1553 = vmatpush.msra.mxu0 %v1344
    %1554 = vmatmul.f32.gmra.mxu0 %v1496
    %v1555 = vpop.f32.mrf.mxu0
    %v1556 = vadd.f32 %v1536, %v1555
    %1557 = vdwg.mxu0
    %1558 = vmatpush.msra.mxu0 %v1468
    %1559 = vmatpush.msra.mxu0 %v1464
    %1560 = vmatpush.msra.mxu0 %v1460
    %1561 = vmatpush.msra.mxu0 %v1456
    %1562 = vmatpush.msra.mxu0 %v1452
    %1563 = vmatpush.msra.mxu0 %v1448
    %1564 = vmatpush.msra.mxu0 %v1444
    %1565 = vmatpush.msra.mxu0 %v1440
    %1566 = vmatpush.msra.mxu0 %v1436
    %1567 = vmatpush.msra.mxu0 %v1432
    %1568 = vmatpush.msra.mxu0 %v1428
    %1569 = vmatpush.msra.mxu0 %v1424
    %1570 = vmatpush.msra.mxu0 %v1420
    %1571 = vmatpush.msra.mxu0 %v1416
    %1572 = vmatpush.msra.mxu0 %v1412
    %1573 = vmatpush.msra.mxu0 %v1408
    %1574 = vmatmul.f32.gmra.mxu0 %v1497
    %v1575 = vpop.f32.mrf.mxu0
    %v1576 = vadd.f32 %v1556, %v1575
    %1577 = vdwg.mxu0
    %1578 = vmatpush.msra.mxu0 %v1277
    %1579 = vmatpush.msra.mxu0 %v1273
    %1580 = vmatpush.msra.mxu0 %v1269
    %1581 = vmatpush.msra.mxu0 %v1265
    %1582 = vmatpush.msra.mxu0 %v1261
    %1583 = vmatpush.msra.mxu0 %v1257
    %1584 = vmatpush.msra.mxu0 %v1253
    %1585 = vmatpush.msra.mxu0 %v1249
    %1586 = vmatpush.msra.mxu0 %v1245
    %1587 = vmatpush.msra.mxu0 %v1241
    %1588 = vmatpush.msra.mxu0 %v1237
    %1589 = vmatpush.msra.mxu0 %v1233
    %1590 = vmatpush.msra.mxu0 %v1229
    %1591 = vmatpush.msra.mxu0 %v1225
    %1592 = vmatpush.msra.mxu0 %v1221
    %1593 = vmatpush.msra.mxu0 %v1217
    %1594 = vmatmul.f32.gmra.mxu0 %v1494
    %v1595 = vpop.f32.mrf.mxu0
    %v1596 = vadd.f32 0.0, %v1595
    %1597 = vdwg.mxu0
    %1598 = vmatpush.msra.mxu0 %v1341
    %1599 = vmatpush.msra.mxu0 %v1337
    %1600 = vmatpush.msra.mxu0 %v1333
    %1601 = vmatpush.msra.mxu0 %v1329
    %1602 = vmatpush.msra.mxu0 %v1325
    %1603 = vmatpush.msra.mxu0 %v1321
    %1604 = vmatpush.msra.mxu0 %v1317
    %1605 = vmatpush.msra.mxu0 %v1313
    %1606 = vmatpush.msra.mxu0 %v1309
    %1607 = vmatpush.msra.mxu0 %v1305
    %1608 = vmatpush.msra.mxu0 %v1301
    %1609 = vmatpush.msra.mxu0 %v1297
    %1610 = vmatpush.msra.mxu0 %v1293
    %1611 = vmatpush.msra.mxu0 %v1289
    %1612 = vmatpush.msra.mxu0 %v1285
    %1613 = vmatpush.msra.mxu0 %v1281
    %1614 = vmatmul.f32.gmra.mxu0 %v1495
    %v1615 = vpop.f32.mrf.mxu0
    %v1616 = vadd.f32 %v1596, %v1615
    %1617 = vdwg.mxu0
    %1618 = vmatpush.msra.mxu0 %v1405
    %1619 = vmatpush.msra.mxu0 %v1401
    %1620 = vmatpush.msra.mxu0 %v1397
    %1621 = vmatpush.msra.mxu0 %v1393
    %1622 = vmatpush.msra.mxu0 %v1389
    %1623 = vmatpush.msra.mxu0 %v1385
    %1624 = vmatpush.msra.mxu0 %v1381
    %1625 = vmatpush.msra.mxu0 %v1377
    %1626 = vmatpush.msra.mxu0 %v1373
    %1627 = vmatpush.msra.mxu0 %v1369
    %1628 = vmatpush.msra.mxu0 %v1365
    %1629 = vmatpush.msra.mxu0 %v1361
    %1630 = vmatpush.msra.mxu0 %v1357
    %1631 = vmatpush.msra.mxu0 %v1353
    %1632 = vmatpush.msra.mxu0 %v1349
    %1633 = vmatpush.msra.mxu0 %v1345
    %1634 = vmatmul.f32.gmra.mxu0 %v1496
    %v1635 = vpop.f32.mrf.mxu0
    %v1636 = vadd.f32 %v1616, %v1635
    %1637 = vdwg.mxu0
    %1638 = vmatpush.msra.mxu0 %v1469
    %1639 = vmatpush.msra.mxu0 %v1465
    %1640 = vmatpush.msra.mxu0 %v1461
    %1641 = vmatpush.msra.mxu0 %v1457
    %1642 = vmatpush.msra.mxu0 %v1453
    %1643 = vmatpush.msra.mxu0 %v1449
    %1644 = vmatpush.msra.mxu0 %v1445
    %1645 = vmatpush.msra.mxu0 %v1441
    %1646 = vmatpush.msra.mxu0 %v1437
    %1647 = vmatpush.msra.mxu0 %v1433
    %1648 = vmatpush.msra.mxu0 %v1429
    %1649 = vmatpush.msra.mxu0 %v1425
    %1650 = vmatpush.msra.mxu0 %v1421
    %1651 = vmatpush.msra.mxu0 %v1417
    %1652 = vmatpush.msra.mxu0 %v1413
    %1653 = vmatpush.msra.mxu0 %v1409
    %1654 = vmatmul.f32.gmra.mxu0 %v1497
    %v1655 = vpop.f32.mrf.mxu0
    %v1656 = vadd.f32 %v1636, %v1655
    %1657 = vdwg.mxu0
    %1658 = vmatpush.msra.mxu0 %v1278
    %1659 = vmatpush.msra.mxu0 %v1274
    %1660 = vmatpush.msra.mxu0 %v1270
    %1661 = vmatpush.msra.mxu0 %v1266
    %1662 = vmatpush.msra.mxu0 %v1262
    %1663 = vmatpush.msra.mxu0 %v1258
    %1664 = vmatpush.msra.mxu0 %v1254
    %1665 = vmatpush.msra.mxu0 %v1250
    %1666 = vmatpush.msra.mxu0 %v1246
    %1667 = vmatpush.msra.mxu0 %v1242
    %1668 = vmatpush.msra.mxu0 %v1238
    %1669 = vmatpush.msra.mxu0 %v1234
    %1670 = vmatpush.msra.mxu0 %v1230
    %1671 = vmatpush.msra.mxu0 %v1226
    %1672 = vmatpush.msra.mxu0 %v1222
    %1673 = vmatpush.msra.mxu0 %v1218
    %1674 = vmatmul.f32.gmra.mxu0 %v1494
    %v1675 = vpop.f32.mrf.mxu0
    %v1676 = vadd.f32 0.0, %v1675
    %1677 = vdwg.mxu0
    %1678 = vmatpush.msra.mxu0 %v1342
    %1679 = vmatpush.msra.mxu0 %v1338
    %1680 = vmatpush.msra.mxu0 %v1334
    %1681 = vmatpush.msra.mxu0 %v1330
    %1682 = vmatpush.msra.mxu0 %v1326
    %1683 = vmatpush.msra.mxu0 %v1322
    %1684 = vmatpush.msra.mxu0 %v1318
    %1685 = vmatpush.msra.mxu0 %v1314
    %1686 = vmatpush.msra.mxu0 %v1310
    %1687 = vmatpush.msra.mxu0 %v1306
    %1688 = vmatpush.msra.mxu0 %v1302
    %1689 = vmatpush.msra.mxu0 %v1298
    %1690 = vmatpush.msra.mxu0 %v1294
    %1691 = vmatpush.msra.mxu0 %v1290
    %1692 = vmatpush.msra.mxu0 %v1286
    %1693 = vmatpush.msra.mxu0 %v1282
    %1694 = vmatmul.f32.gmra.mxu0 %v1495
    %v1695 = vpop.f32.mrf.mxu0
    %v1696 = vadd.f32 %v1676, %v1695
    %1697 = vdwg.mxu0
    %1698 = vmatpush.msra.mxu0 %v1406
    %1699 = vmatpush.msra.mxu0 %v1402
    %1700 = vmatpush.msra.mxu0 %v1398
    %1701 = vmatpush.msra.mxu0 %v1394
    %1702 = vmatpush.msra.mxu0 %v1390
    %1703 = vmatpush.msra.mxu0 %v1386
    %1704 = vmatpush.msra.mxu0 %v1382
    %1705 = vmatpush.msra.mxu0 %v1378
    %1706 = vmatpush.msra.mxu0 %v1374
    %1707 = vmatpush.msra.mxu0 %v1370
    %1708 = vmatpush.msra.mxu0 %v1366
    %1709 = vmatpush.msra.mxu0 %v1362
    %1710 = vmatpush.msra.mxu0 %v1358
    %1711 = vmatpush.msra.mxu0 %v1354
    %1712 = vmatpush.msra.mxu0 %v1350
    %1713 = vmatpush.msra.mxu0 %v1346
    %1714 = vmatmul.f32.gmra.mxu0 %v1496
    %v1715 = vpop.f32.mrf.mxu0
    %v1716 = vadd.f32 %v1696, %v1715
    %1717 = vdwg.mxu0
    %1718 = vmatpush.msra.mxu0 %v1470
    %1719 = vmatpush.msra.mxu0 %v1466
    %1720 = vmatpush.msra.mxu0 %v1462
    %1721 = vmatpush.msra.mxu0 %v1458
    %1722 = vmatpush.msra.mxu0 %v1454
    %1723 = vmatpush.msra.mxu0 %v1450
    %1724 = vmatpush.msra.mxu0 %v1446
    %1725 = vmatpush.msra.mxu0 %v1442
    %1726 = vmatpush.msra.mxu0 %v1438
    %1727 = vmatpush.msra.mxu0 %v1434
    %1728 = vmatpush.msra.mxu0 %v1430
    %1729 = vmatpush.msra.mxu0 %v1426
    %1730 = vmatpush.msra.mxu0 %v1422
    %1731 = vmatpush.msra.mxu0 %v1418
    %1732 = vmatpush.msra.mxu0 %v1414
    %1733 = vmatpush.msra.mxu0 %v1410
    %1734 = vmatmul.f32.gmra.mxu0 %v1497
    %v1735 = vpop.f32.mrf.mxu0
    %v1736 = vadd.f32 %v1716, %v1735
    %1737 = vdwg.mxu0
    %1738 = vmatpush.msra.mxu0 %v1279
    %1739 = vmatpush.msra.mxu0 %v1275
    %1740 = vmatpush.msra.mxu0 %v1271
    %1741 = vmatpush.msra.mxu0 %v1267
    %1742 = vmatpush.msra.mxu0 %v1263
    %1743 = vmatpush.msra.mxu0 %v1259
    %1744 = vmatpush.msra.mxu0 %v1255
    %1745 = vmatpush.msra.mxu0 %v1251
    %1746 = vmatpush.msra.mxu0 %v1247
    %1747 = vmatpush.msra.mxu0 %v1243
    %1748 = vmatpush.msra.mxu0 %v1239
    %1749 = vmatpush.msra.mxu0 %v1235
    %1750 = vmatpush.msra.mxu0 %v1231
    %1751 = vmatpush.msra.mxu0 %v1227
    %1752 = vmatpush.msra.mxu0 %v1223
    %1753 = vmatpush.msra.mxu0 %v1219
    %1754 = vmatmul.f32.gmra.mxu0 %v1494
    %v1755 = vpop.f32.mrf.mxu0
    %v1756 = vadd.f32 0.0, %v1755
    %1757 = vdwg.mxu0
    %1758 = vmatpush.msra.mxu0 %v1343
    %1759 = vmatpush.msra.mxu0 %v1339
    %1760 = vmatpush.msra.mxu0 %v1335
    %1761 = vmatpush.msra.mxu0 %v1331
    %1762 = vmatpush.msra.mxu0 %v1327
    %1763 = vmatpush.msra.mxu0 %v1323
    %1764 = vmatpush.msra.mxu0 %v1319
    %1765 = vmatpush.msra.mxu0 %v1315
    %1766 = vmatpush.msra.mxu0 %v1311
    %1767 = vmatpush.msra.mxu0 %v1307
    %1768 = vmatpush.msra.mxu0 %v1303
    %1769 = vmatpush.msra.mxu0 %v1299
    %1770 = vmatpush.msra.mxu0 %v1295
    %1771 = vmatpush.msra.mxu0 %v1291
    %1772 = vmatpush.msra.mxu0 %v1287
    %1773 = vmatpush.msra.mxu0 %v1283
    %1774 = vmatmul.f32.gmra.mxu0 %v1495
    %v1775 = vpop.f32.mrf.mxu0
    %v1776 = vadd.f32 %v1756, %v1775
    %1777 = vdwg.mxu0
    %1778 = vmatpush.msra.mxu0 %v1407
    %1779 = vmatpush.msra.mxu0 %v1403
    %1780 = vmatpush.msra.mxu0 %v1399
    %1781 = vmatpush.msra.mxu0 %v1395
    %1782 = vmatpush.msra.mxu0 %v1391
    %1783 = vmatpush.msra.mxu0 %v1387
    %1784 = vmatpush.msra.mxu0 %v1383
    %1785 = vmatpush.msra.mxu0 %v1379
    %1786 = vmatpush.msra.mxu0 %v1375
    %1787 = vmatpush.msra.mxu0 %v1371
    %1788 = vmatpush.msra.mxu0 %v1367
    %1789 = vmatpush.msra.mxu0 %v1363
    %1790 = vmatpush.msra.mxu0 %v1359
    %1791 = vmatpush.msra.mxu0 %v1355
    %1792 = vmatpush.msra.mxu0 %v1351
    %1793 = vmatpush.msra.mxu0 %v1347
    %1794 = vmatmul.f32.gmra.mxu0 %v1496
    %v1795 = vpop.f32.mrf.mxu0
    %v1796 = vadd.f32 %v1776, %v1795
    %1797 = vdwg.mxu0
    %1798 = vmatpush.msra.mxu0 %v1471
    %1799 = vmatpush.msra.mxu0 %v1467
    %1800 = vmatpush.msra.mxu0 %v1463
    %1801 = vmatpush.msra.mxu0 %v1459
    %1802 = vmatpush.msra.mxu0 %v1455
    %1803 = vmatpush.msra.mxu0 %v1451
    %1804 = vmatpush.msra.mxu0 %v1447
    %1805 = vmatpush.msra.mxu0 %v1443
    %1806 = vmatpush.msra.mxu0 %v1439
    %1807 = vmatpush.msra.mxu0 %v1435
    %1808 = vmatpush.msra.mxu0 %v1431
    %1809 = vmatpush.msra.mxu0 %v1427
    %1810 = vmatpush.msra.mxu0 %v1423
    %1811 = vmatpush.msra.mxu0 %v1419
    %1812 = vmatpush.msra.mxu0 %v1415
    %1813 = vmatpush.msra.mxu0 %v1411
    %1814 = vmatmul.f32.gmra.mxu0 %v1497
    %v1815 = vpop.f32.mrf.mxu0
    %v1816 = vadd.f32 %v1796, %v1815
    %1817 = vdwg.mxu0
    %v1818 = vpack.c.bf16 %v1576, %v1576
    %v1819 = vpack.c.bf16 %v1656, %v1656
    %v1820 = vpack.c.bf16 %v1736, %v1736
    %v1821 = vpack.c.bf16 %v1816, %v1816
    %v1822 = vld [vmem:[#allocation8] sm:$0xf]
    %v1823 = vld [vmem:[#allocation8 + $0x4] sm:$0xf]
    %v1824 = vld [vmem:[#allocation8 + $0x8] sm:$0xf]
    %v1825 = vld [vmem:[#allocation8 + $0xc] sm:$0xf]
    %v1826 = vld [vmem:[#allocation8 + $0x10] sm:$0xf]
    %v1827 = vld [vmem:[#allocation8 + $0x14] sm:$0xf]
    %v1828 = vld [vmem:[#allocation8 + $0x18] sm:$0xf]
    %v1829 = vld [vmem:[#allocation8 + $0x1c] sm:$0xf]
    %v1830 = vld [vmem:[#allocation8 + $0x20] sm:$0xf]
    %v1831 = vld [vmem:[#allocation8 + $0x24] sm:$0xf]
    %v1832 = vld [vmem:[#allocation8 + $0x28] sm:$0xf]
    %v1833 = vld [vmem:[#allocation8 + $0x2c] sm:$0xf]
    %v1834 = vld [vmem:[#allocation8 + $0x30] sm:$0xf]
    %v1835 = vld [vmem:[#allocation8 + $0x34] sm:$0xf]
    %v1836 = vld [vmem:[#allocation8 + $0x38] sm:$0xf]
    %v1837 = vld [vmem:[#allocation8 + $0x3c] sm:$0xf]
    %v1838 = vld [vmem:[#allocation8 + $0x40] sm:$0xf]
    %v1839 = vld [vmem:[#allocation8 + $0x44] sm:$0xf]
    %v1840 = vld [vmem:[#allocation8 + $0x48] sm:$0xf]
    %v1841 = vld [vmem:[#allocation8 + $0x4c] sm:$0xf]
    %v1842 = vld [vmem:[#allocation8 + $0x50] sm:$0xf]
    %v1843 = vld [vmem:[#allocation8 + $0x54] sm:$0xf]
    %v1844 = vld [vmem:[#allocation8 + $0x58] sm:$0xf]
    %v1845 = vld [vmem:[#allocation8 + $0x5c] sm:$0xf]
    %v1846 = vld [vmem:[#allocation8 + $0x60] sm:$0xf]
    %v1847 = vld [vmem:[#allocation8 + $0x64] sm:$0xf]
    %v1848 = vld [vmem:[#allocation8 + $0x68] sm:$0xf]
    %v1849 = vld [vmem:[#allocation8 + $0x6c] sm:$0xf]
    %v1850 = vld [vmem:[#allocation8 + $0x70] sm:$0xf]
    %v1851 = vld [vmem:[#allocation8 + $0x74] sm:$0xf]
    %v1852 = vld [vmem:[#allocation8 + $0x78] sm:$0xf]
    %v1853 = vld [vmem:[#allocation8 + $0x7c] sm:$0xf]
    %v1854 = vld [vmem:[#allocation8 + $0x80] sm:$0xf]
    %v1855 = vld [vmem:[#allocation8 + $0x84] sm:$0xf]
    %v1856 = vld [vmem:[#allocation8 + $0x88] sm:$0xf]
    %v1857 = vld [vmem:[#allocation8 + $0x8c] sm:$0xf]
    %v1858 = vld [vmem:[#allocation8 + $0x90] sm:$0xf]
    %v1859 = vld [vmem:[#allocation8 + $0x94] sm:$0xf]
    %v1860 = vld [vmem:[#allocation8 + $0x98] sm:$0xf]
    %v1861 = vld [vmem:[#allocation8 + $0x9c] sm:$0xf]
    %v1862 = vld [vmem:[#allocation8 + $0xa0] sm:$0xf]
    %v1863 = vld [vmem:[#allocation8 + $0xa4] sm:$0xf]
    %v1864 = vld [vmem:[#allocation8 + $0xa8] sm:$0xf]
    %v1865 = vld [vmem:[#allocation8 + $0xac] sm:$0xf]
    %v1866 = vld [vmem:[#allocation8 + $0xb0] sm:$0xf]
    %v1867 = vld [vmem:[#allocation8 + $0xb4] sm:$0xf]
    %v1868 = vld [vmem:[#allocation8 + $0xb8] sm:$0xf]
    %v1869 = vld [vmem:[#allocation8 + $0xbc] sm:$0xf]
    %v1870 = vld [vmem:[#allocation8 + $0xc0] sm:$0xf]
    %v1871 = vld [vmem:[#allocation8 + $0xc4] sm:$0xf]
    %v1872 = vld [vmem:[#allocation8 + $0xc8] sm:$0xf]
    %v1873 = vld [vmem:[#allocation8 + $0xcc] sm:$0xf]
    %v1874 = vld [vmem:[#allocation8 + $0xd0] sm:$0xf]
    %v1875 = vld [vmem:[#allocation8 + $0xd4] sm:$0xf]
    %v1876 = vld [vmem:[#allocation8 + $0xd8] sm:$0xf]
    %v1877 = vld [vmem:[#allocation8 + $0xdc] sm:$0xf]
    %v1878 = vld [vmem:[#allocation8 + $0xe0] sm:$0xf]
    %v1879 = vld [vmem:[#allocation8 + $0xe4] sm:$0xf]
    %v1880 = vld [vmem:[#allocation8 + $0xe8] sm:$0xf]
    %v1881 = vld [vmem:[#allocation8 + $0xec] sm:$0xf]
    %v1882 = vld [vmem:[#allocation8 + $0xf0] sm:$0xf]
    %v1883 = vld [vmem:[#allocation8 + $0xf4] sm:$0xf]
    %v1884 = vld [vmem:[#allocation8 + $0xf8] sm:$0xf]
    %v1885 = vld [vmem:[#allocation8 + $0xfc] sm:$0xf]
    %v1886 = vld [vmem:[%s4] sm:$0x1]
    %v1888 = vperm.slane %v1886, 0
    %v1954 = vunpack.c.l.b16 %v1822
    %v1955 = vunpack.c.l.b16 %v1823
    %v1956 = vunpack.c.l.b16 %v1824
    %v1957 = vunpack.c.l.b16 %v1825
    %v1958 = vunpack.c.l.b16 %v1826
    %v1959 = vunpack.c.l.b16 %v1827
    %v1960 = vunpack.c.l.b16 %v1828
    %v1961 = vunpack.c.l.b16 %v1829
    %v1962 = vunpack.c.l.b16 %v1830
    %v1963 = vunpack.c.l.b16 %v1831
    %v1964 = vunpack.c.l.b16 %v1832
    %v1965 = vunpack.c.l.b16 %v1833
    %v1966 = vunpack.c.l.b16 %v1834
    %v1967 = vunpack.c.l.b16 %v1835
    %v1968 = vunpack.c.l.b16 %v1836
    %v1969 = vunpack.c.l.b16 %v1837
    %v1970 = vunpack.c.l.b16 %v1838
    %v1971 = vunpack.c.l.b16 %v1839
    %v1972 = vunpack.c.l.b16 %v1840
    %v1973 = vunpack.c.l.b16 %v1841
    %v1974 = vunpack.c.l.b16 %v1842
    %v1975 = vunpack.c.l.b16 %v1843
    %v1976 = vunpack.c.l.b16 %v1844
    %v1977 = vunpack.c.l.b16 %v1845
    %v1978 = vunpack.c.l.b16 %v1846
    %v1979 = vunpack.c.l.b16 %v1847
    %v1980 = vunpack.c.l.b16 %v1848
    %v1981 = vunpack.c.l.b16 %v1849
    %v1982 = vunpack.c.l.b16 %v1850
    %v1983 = vunpack.c.l.b16 %v1851
    %v1984 = vunpack.c.l.b16 %v1852
    %v1985 = vunpack.c.l.b16 %v1853
    %v1986 = vunpack.c.l.b16 %v1854
    %v1987 = vunpack.c.l.b16 %v1855
    %v1988 = vunpack.c.l.b16 %v1856
    %v1989 = vunpack.c.l.b16 %v1857
    %v1990 = vunpack.c.l.b16 %v1858
    %v1991 = vunpack.c.l.b16 %v1859
    %v1992 = vunpack.c.l.b16 %v1860
    %v1993 = vunpack.c.l.b16 %v1861
    %v1994 = vunpack.c.l.b16 %v1862
    %v1995 = vunpack.c.l.b16 %v1863
    %v1996 = vunpack.c.l.b16 %v1864
    %v1997 = vunpack.c.l.b16 %v1865
    %v1998 = vunpack.c.l.b16 %v1866
    %v1999 = vunpack.c.l.b16 %v1867
    %v2000 = vunpack.c.l.b16 %v1868
    %v2001 = vunpack.c.l.b16 %v1869
    %v2002 = vunpack.c.l.b16 %v1870
    %v2003 = vunpack.c.l.b16 %v1871
    %v2004 = vunpack.c.l.b16 %v1872
    %v2005 = vunpack.c.l.b16 %v1873
    %v2006 = vunpack.c.l.b16 %v1874
    %v2007 = vunpack.c.l.b16 %v1875
    %v2008 = vunpack.c.l.b16 %v1876
    %v2009 = vunpack.c.l.b16 %v1877
    %v2010 = vunpack.c.l.b16 %v1878
    %v2011 = vunpack.c.l.b16 %v1879
    %v2012 = vunpack.c.l.b16 %v1880
    %v2013 = vunpack.c.l.b16 %v1881
    %v2014 = vunpack.c.l.b16 %v1882
    %v2015 = vunpack.c.l.b16 %v1883
    %v2016 = vunpack.c.l.b16 %v1884
    %v2017 = vunpack.c.l.b16 %v1885
    %v2018 = vpack.c.b16 %v1955, %v1954
    %v2019 = vpack.c.b16 %v1957, %v1956
    %v2020 = vpack.c.b16 %v1959, %v1958
    %v2021 = vpack.c.b16 %v1961, %v1960
    %v2022 = vpack.c.b16 %v1963, %v1962
    %v2023 = vpack.c.b16 %v1965, %v1964
    %v2024 = vpack.c.b16 %v1967, %v1966
    %v2025 = vpack.c.b16 %v1969, %v1968
    %v2026 = vpack.c.b16 %v1971, %v1970
    %v2027 = vpack.c.b16 %v1973, %v1972
    %v2028 = vpack.c.b16 %v1975, %v1974
    %v2029 = vpack.c.b16 %v1977, %v1976
    %v2030 = vpack.c.b16 %v1979, %v1978
    %v2031 = vpack.c.b16 %v1981, %v1980
    %v2032 = vpack.c.b16 %v1983, %v1982
    %v2033 = vpack.c.b16 %v1985, %v1984
    %v2034 = vpack.c.b16 %v1987, %v1986
    %v2035 = vpack.c.b16 %v1989, %v1988
    %v2036 = vpack.c.b16 %v1991, %v1990
    %v2037 = vpack.c.b16 %v1993, %v1992
    %v2038 = vpack.c.b16 %v1995, %v1994
    %v2039 = vpack.c.b16 %v1997, %v1996
    %v2040 = vpack.c.b16 %v1999, %v1998
    %v2041 = vpack.c.b16 %v2001, %v2000
    %v2042 = vpack.c.b16 %v2003, %v2002
    %v2043 = vpack.c.b16 %v2005, %v2004
    %v2044 = vpack.c.b16 %v2007, %v2006
    %v2045 = vpack.c.b16 %v2009, %v2008
    %v2046 = vpack.c.b16 %v2011, %v2010
    %v2047 = vpack.c.b16 %v2013, %v2012
    %v2048 = vpack.c.b16 %v2015, %v2014
    %v2049 = vpack.c.b16 %v2017, %v2016
    %2082 = vmatpush.bf16.msra.mxu0 %v2025
    %2083 = vmatpush.bf16.msra.mxu0 %v2024
    %2084 = vmatpush.bf16.msra.mxu0 %v2023
    %2085 = vmatpush.bf16.msra.mxu0 %v2022
    %2086 = vmatpush.bf16.msra.mxu0 %v2021
    %2087 = vmatpush.bf16.msra.mxu0 %v2020
    %2088 = vmatpush.bf16.msra.mxu0 %v2019
    %2089 = vmatpush.bf16.msra.mxu0 %v2018
    %2090 = vmatmul.bf16.gmra.mxu0 %v1818
    %v2091 = vpop.f32.mrf.mxu0
    %v2092 = vadd.f32 %v1888, %v2091
    %v2093 = vpop.f32.mrf.mxu0
    %2094 = vdwg.mxu0
    %2095 = vmatpush.bf16.msra.mxu0 %v2033
    %2096 = vmatpush.bf16.msra.mxu0 %v2032
    %2097 = vmatpush.bf16.msra.mxu0 %v2031
    %2098 = vmatpush.bf16.msra.mxu0 %v2030
    %2099 = vmatpush.bf16.msra.mxu0 %v2029
    %2100 = vmatpush.bf16.msra.mxu0 %v2028
    %2101 = vmatpush.bf16.msra.mxu0 %v2027
    %2102 = vmatpush.bf16.msra.mxu0 %v2026
    %2103 = vmatmul.bf16.gmra.mxu0 %v1819
    %v2104 = vpop.f32.mrf.mxu0
    %v2105 = vadd.f32 %v2092, %v2104
    %v2106 = vpop.f32.mrf.mxu0
    %2107 = vdwg.mxu0
    %2108 = vmatpush.bf16.msra.mxu0 %v2041
    %2109 = vmatpush.bf16.msra.mxu0 %v2040
    %2110 = vmatpush.bf16.msra.mxu0 %v2039
    %2111 = vmatpush.bf16.msra.mxu0 %v2038
    %2112 = vmatpush.bf16.msra.mxu0 %v2037
    %2113 = vmatpush.bf16.msra.mxu0 %v2036
    %2114 = vmatpush.bf16.msra.mxu0 %v2035
    %2115 = vmatpush.bf16.msra.mxu0 %v2034
    %2116 = vmatmul.bf16.gmra.mxu0 %v1820
    %v2117 = vpop.f32.mrf.mxu0
    %v2118 = vadd.f32 %v2105, %v2117
    %v2119 = vpop.f32.mrf.mxu0
    %2120 = vdwg.mxu0
    %2121 = vmatpush.bf16.msra.mxu0 %v2049
    %2122 = vmatpush.bf16.msra.mxu0 %v2048
    %2123 = vmatpush.bf16.msra.mxu0 %v2047
    %2124 = vmatpush.bf16.msra.mxu0 %v2046
    %2125 = vmatpush.bf16.msra.mxu0 %v2045
    %2126 = vmatpush.bf16.msra.mxu0 %v2044
    %2127 = vmatpush.bf16.msra.mxu0 %v2043
    %2128 = vmatpush.bf16.msra.mxu0 %v2042
    %2129 = vmatmul.bf16.gmra.mxu0 %v1821
    %v2130 = vpop.f32.mrf.mxu0
    %v2131 = vadd.f32 %v2118, %v2130
    %v2132 = vpop.f32.mrf.mxu0
    %2133 = vdwg.mxu0
    %2134 = vst [vmem:[#allocation10] sm:$0x3] %v2131
    // Predicated region
    $region38: #{tpu_custom_call.1} parent=1 // pred_check
      _
    $region39: #{tpu_custom_call.1} parent=1 // pred_check_branch
      %2136 = sbr.rel (0) target = $region41
    $region40: #{tpu_custom_call.1} parent=1 // pred_region
      %2138 = vsyncadd [#allocation4], 0
      %s2140 = sshll.u32 [#allocation10], 4
      %s2141 = int_to_ptr.vmem [resolvable:$true] %s2140
      %s2142 = sshll.u32 %s5, 4
      %s2143 = int_to_ptr.hbm [resolvable:$true] %s2142
      %2145 = dma.vmem_to_hbm [thread:$0]  %s2141, 32, %s2143, [#allocation4]
    $region41: #{tpu_custom_call.1} parent=1 // pred_fallthru
      _
    // Predicated region
    $region42: #{tpu_custom_call.1} parent=1 // pred_check
      _
    $region43: #{tpu_custom_call.1} parent=1 // pred_check_branch
      %2147 = sbr.rel (0) target = $region45
    $region44: #{tpu_custom_call.1} parent=1 // pred_region
      %2149 = dma.done [#allocation4], 32
    $region45: #{tpu_custom_call.1} parent=1 // pred_fallthru
      _
    %2150 = vsyncpa [#allocation3], 1
    %2151 = vsyncpa [#allocation6], 1
    %2152 = vsyncpa [#allocation9], 1
    %2153 = vsyncpa [#allocation4], 1

</llo_original>
